<compile_context>
chip_gen: v6e
topology: v6e:2x2x1
jax: 0.10.0
libtpu: 0.0.40
codegen_flags: <defaults>
</compile_context>

<pallas_src>
import functools

import jax
import jax.numpy as jnp
from jax import lax
from jax.experimental import pallas as pl
from jax.experimental.pallas import tpu as pltpu


def _gat_net_kernel(x_ref, mask_ref, w1_ref, ws1_ref, wd1_ref, b1_ref,
                    w2_ref, ws2_ref, wd2_ref, b2_ref, out_ref, *, heads, f1):
  """Fused Net.forward on a dense adjacency mask (PyG GATConv semantics)."""
  f32 = jnp.float32
  x = x_ref[...].astype(f32)            # [N, Fin]
  mask_bias = mask_ref[...]             # [N_dst, N_src], 0 on edges, -1e30 off

  # ---------- layer 1: GATConv(Fin -> f1, heads=H, concat=True) + ELU -------
  feat1 = jnp.dot(x, w1_ref[...], preferred_element_type=f32)       # [N, H*f1]
  # all-head attention projections (att vectors folded into weights upstream)
  a_src = lax.dot_general(ws1_ref[...], x, (((1,), (1,)), ((), ())),
                          preferred_element_type=f32)               # [H, N_src]
  a_dst = jnp.dot(x, wd1_ref[...], preferred_element_type=f32)      # [N_dst, H]

  cols = []
  for h in range(heads):
    e = a_dst[:, h:h + 1] + a_src[h:h + 1, :]          # [N_dst, N_src]
    e = jnp.where(e > 0, e, 0.2 * e)                   # LeakyReLU(0.2)
    e = e + mask_bias                                  # additive -inf mask
    m = jnp.max(e, axis=-1, keepdims=True)             # softmax over sources
    p = jnp.exp(e - m)
    s = jnp.sum(p, axis=-1, keepdims=True)
    o = jnp.dot(p, feat1[:, h * f1:(h + 1) * f1],
                preferred_element_type=f32)            # [N, f1]
    cols.append(o * pl.reciprocal(s, approx=True))     # normalize after matmul
  h1 = jnp.concatenate(cols, axis=-1) + b1_ref[...]    # [N, H*f1], stays in regs
  h1 = jnp.where(h1 > 0, h1, jnp.exp(h1) - 1.0)        # ELU(alpha=1)

  # ------ layer 2: GATConv(H*f1 -> C, heads=1, concat=False) + log_softmax --
  feat2 = jnp.dot(h1, w2_ref[...], preferred_element_type=f32)      # [N, C]
  a_src2 = lax.dot_general(ws2_ref[...], h1, (((1,), (1,)), ((), ())),
                           preferred_element_type=f32)              # [1, N]
  a_dst2 = jnp.dot(h1, wd2_ref[...], preferred_element_type=f32)    # [N, 1]
  e2 = a_dst2 + a_src2                                               # [N, N]
  e2 = jnp.where(e2 > 0, e2, 0.2 * e2)
  e2 = e2 + mask_bias
  m2 = jnp.max(e2, axis=-1, keepdims=True)
  p2 = jnp.exp(e2 - m2)
  s2 = jnp.sum(p2, axis=-1, keepdims=True)
  o2 = jnp.dot(p2, feat2, preferred_element_type=f32)                # [N, C]
  y = o2 * pl.reciprocal(s2, approx=True) + b2_ref[...]

  my = jnp.max(y, axis=-1, keepdims=True)                            # log_softmax
  lse = jnp.log(jnp.sum(jnp.exp(y - my), axis=-1, keepdims=True)) + my
  out_ref[...] = y - lse                                             # single store


def net_forward(x, adj, params):
  """Net.forward: dropout(id) -> elu(GATConv1) -> dropout(id) -> GATConv2 -> log_softmax."""
  (W1, as1, ad1, b1), (W2, as2, ad2, b2) = params
  N, Fin = x.shape
  H, F1 = as1.shape
  C = W2.shape[1]

  # Fold attention vectors into the weights (wrapper-side, done once by XLA):
  #   a_src[h, j] = <x_j, ws1[h]>,  a_dst[i, h] = <x_i, wd1[:, h]>
  W1r = W1.reshape(Fin, H, F1)
  ws1 = jnp.einsum('fhd,hd->hf', W1r, as1)               # [H, Fin]
  wd1 = jnp.einsum('fhd,hd->fh', W1r, ad1)               # [Fin, H]
  ws2 = as2 @ W2.T                                       # [1, H*F1]
  wd2 = W2 @ ad2.T                                       # [H*F1, 1]
  mask_bias = jnp.where(adj > 0, 0.0, -1e30).astype(jnp.float32)

  kernel = functools.partial(_gat_net_kernel, heads=H, f1=F1)
  vmem = pl.BlockSpec(memory_space=pltpu.MemorySpace.VMEM)
  return pl.pallas_call(
      kernel,
      out_shape=jax.ShapeDtypeStruct((N, C), jnp.float32),
      in_specs=[vmem] * 10,
      out_specs=vmem,
  )(x, mask_bias, W1, ws1, wd1, b1, W2, ws2, wd2, b2)


def glorot(key, shape):
  fan_in, fan_out = shape[0], shape[-1]
  limit = (6.0 / (fan_in + fan_out)) ** 0.5
  return jax.random.uniform(key, shape, jnp.float32, -limit, limit)


if __name__ == "__main__":
  key = jax.random.PRNGKey(0)
  keys = jax.random.split(key, 10)

  # Small synthetic graph consistent with the module:
  #   N nodes, F_in input features, conv1: heads=8, out=8 (concat -> 64),
  #   conv2: heads=1, out=C classes (concat=False), then log_softmax.
  N, F_in, H, F_hid, C, E = 32, 16, 8, 8, 4, 96

  x = jax.random.normal(keys[0], (N, F_in), jnp.float32)
  src = jax.random.randint(keys[1], (E,), 0, N)
  dst = jax.random.randint(keys[2], (E,), 0, N)
  # edge_index = [src; dst]; densify: adj[dst, src] = 1, plus self-loops
  adj = jnp.zeros((N, N), jnp.float32).at[dst, src].set(1.0)
  adj = jnp.maximum(adj, jnp.eye(N, dtype=jnp.float32))

  # Deterministic parameter init (GATConv1: F_in -> 8, heads=8; GATConv2: 64 -> C).
  W1 = glorot(keys[3], (F_in, H * F_hid))
  att_src1 = glorot(keys[4], (H, F_hid))
  att_dst1 = glorot(keys[5], (H, F_hid))
  b1 = jnp.zeros((1, H * F_hid), jnp.float32)

  W2 = glorot(keys[6], (H * F_hid, C))
  att_src2 = glorot(keys[7], (1, C))
  att_dst2 = glorot(keys[8], (1, C))
  b2 = jnp.zeros((1, C), jnp.float32)

  params = ((W1, att_src1, att_dst1, b1), (W2, att_src2, att_dst2, b2))

  net = jax.jit(net_forward)
  out = net(x, adj, params)
  out = jax.block_until_ready(out)
  assert out.shape == (N, C)
  assert bool(jnp.all(jnp.isfinite(out)))
  print("KERNEL_OK")
</pallas_src>

<mosaic_0001>
module attributes {stable_mosaic.version = 11 : i64} {
  func.func @_gat_net_kernel(%arg0: memref<32x16xf32, #tpu.memory_space<vmem>>, %arg1: memref<32x32xf32, #tpu.memory_space<vmem>>, %arg2: memref<16x64xf32, #tpu.memory_space<vmem>>, %arg3: memref<8x16xf32, #tpu.memory_space<vmem>>, %arg4: memref<16x8xf32, #tpu.memory_space<vmem>>, %arg5: memref<1x64xf32, #tpu.memory_space<vmem>>, %arg6: memref<64x4xf32, #tpu.memory_space<vmem>>, %arg7: memref<1x64xf32, #tpu.memory_space<vmem>>, %arg8: memref<64x1xf32, #tpu.memory_space<vmem>>, %arg9: memref<1x4xf32, #tpu.memory_space<vmem>>, %arg10: memref<32x4xf32, #tpu.memory_space<vmem>>) attributes {dimension_semantics = [], scalar_prefetch = 0 : i64, scratch_operands = 0 : i64, tpu.core_type = #tpu.core_type<tc>} {
    %c0 = arith.constant 0 : index
    %c0_0 = arith.constant 0 : index
    %0 = vector.load %arg0[%c0, %c0_0] : memref<32x16xf32, #tpu.memory_space<vmem>>, vector<32x16xf32>
    %c0_1 = arith.constant 0 : index
    %c0_2 = arith.constant 0 : index
    %1 = vector.load %arg1[%c0_1, %c0_2] : memref<32x32xf32, #tpu.memory_space<vmem>>, vector<32x32xf32>
    %c0_3 = arith.constant 0 : index
    %c0_4 = arith.constant 0 : index
    %2 = vector.load %arg2[%c0_3, %c0_4] : memref<16x64xf32, #tpu.memory_space<vmem>>, vector<16x64xf32>
    %cst = arith.constant dense<0.000000e+00> : vector<32x64xf32>
    %3 = tpu.matmul %0, %2, %cst {dimension_numbers = #tpu.dot_dimension_numbers<[1], [0], [0], [1], [0, 0, 1, 1], [], []>} : vector<32x16xf32>, vector<16x64xf32>, vector<32x64xf32> -> vector<32x64xf32>
    %c0_5 = arith.constant 0 : index
    %c0_6 = arith.constant 0 : index
    %4 = vector.load %arg3[%c0_5, %c0_6] : memref<8x16xf32, #tpu.memory_space<vmem>>, vector<8x16xf32>
    %cst_7 = arith.constant dense<0.000000e+00> : vector<8x32xf32>
    %5 = tpu.matmul %4, %0, %cst_7 {dimension_numbers = #tpu.dot_dimension_numbers<[1], [1], [0], [0], [0, 0, 1, 0], [], []>} : vector<8x16xf32>, vector<32x16xf32>, vector<8x32xf32> -> vector<8x32xf32>
    %c0_8 = arith.constant 0 : index
    %c0_9 = arith.constant 0 : index
    %6 = vector.load %arg4[%c0_8, %c0_9] : memref<16x8xf32, #tpu.memory_space<vmem>>, vector<16x8xf32>
    %cst_10 = arith.constant dense<0.000000e+00> : vector<32x8xf32>
    %7 = tpu.matmul %0, %6, %cst_10 {dimension_numbers = #tpu.dot_dimension_numbers<[1], [0], [0], [1], [0, 0, 1, 1], [], []>} : vector<32x16xf32>, vector<16x8xf32>, vector<32x8xf32> -> vector<32x8xf32>
    %8 = vector.extract_strided_slice %7 {offsets = [0, 0], sizes = [32, 1], strides = [1, 1]} : vector<32x8xf32> to vector<32x1xf32>
    %9 = vector.extract_strided_slice %5 {offsets = [0, 0], sizes = [1, 32], strides = [1, 1]} : vector<8x32xf32> to vector<1x32xf32>
    %10 = vector.broadcast %8 : vector<32x1xf32> to vector<32x32xf32>
    %11 = vector.broadcast %9 : vector<1x32xf32> to vector<32x32xf32>
    %12 = arith.addf %10, %11 : vector<32x32xf32>
    %cst_11 = arith.constant 0.000000e+00 : f32
    %13 = vector.broadcast %cst_11 : f32 to vector<32x32xf32>
    %14 = arith.cmpf ogt, %12, %13 : vector<32x32xf32>
    %cst_12 = arith.constant 2.000000e-01 : f32
    %15 = vector.broadcast %cst_12 : f32 to vector<32x32xf32>
    %16 = arith.mulf %15, %12 : vector<32x32xf32>
    %17 = arith.select %14, %12, %16 : vector<32x32xi1>, vector<32x32xf32>
    %18 = arith.addf %17, %1 : vector<32x32xf32>
    %cst_13 = arith.constant dense<0xFF800000> : vector<32xf32>
    %19 = vector.multi_reduction <maximumf>, %18, %cst_13 [1] : vector<32x32xf32> to vector<32xf32>
    %20 = vector.shape_cast %19 : vector<32xf32> to vector<32x1xf32>
    %21 = vector.broadcast %20 : vector<32x1xf32> to vector<32x32xf32>
    %22 = arith.subf %18, %21 : vector<32x32xf32>
    %23 = math.exp %22 : vector<32x32xf32>
    %cst_14 = arith.constant dense<0.000000e+00> : vector<32xf32>
    %24 = vector.multi_reduction <add>, %23, %cst_14 [1] : vector<32x32xf32> to vector<32xf32>
    %25 = vector.shape_cast %24 : vector<32xf32> to vector<32x1xf32>
    %26 = vector.extract_strided_slice %3 {offsets = [0, 0], sizes = [32, 8], strides = [1, 1]} : vector<32x64xf32> to vector<32x8xf32>
    %cst_15 = arith.constant dense<0.000000e+00> : vector<32x8xf32>
    %27 = tpu.matmul %23, %26, %cst_15 {dimension_numbers = #tpu.dot_dimension_numbers<[1], [0], [0], [1], [0, 0, 1, 1], [], []>} : vector<32x32xf32>, vector<32x8xf32>, vector<32x8xf32> -> vector<32x8xf32>
    %28 = tpu.reciprocal %25 {approx = true} : vector<32x1xf32> -> vector<32x1xf32>
    %29 = vector.broadcast %28 : vector<32x1xf32> to vector<32x8xf32>
    %30 = arith.mulf %27, %29 : vector<32x8xf32>
    %31 = vector.extract_strided_slice %7 {offsets = [0, 1], sizes = [32, 1], strides = [1, 1]} : vector<32x8xf32> to vector<32x1xf32>
    %32 = vector.extract_strided_slice %5 {offsets = [1, 0], sizes = [1, 32], strides = [1, 1]} : vector<8x32xf32> to vector<1x32xf32>
    %33 = vector.broadcast %31 : vector<32x1xf32> to vector<32x32xf32>
    %34 = vector.broadcast %32 : vector<1x32xf32> to vector<32x32xf32>
    %35 = arith.addf %33, %34 : vector<32x32xf32>
    %cst_16 = arith.constant 0.000000e+00 : f32
    %36 = vector.broadcast %cst_16 : f32 to vector<32x32xf32>
    %37 = arith.cmpf ogt, %35, %36 : vector<32x32xf32>
    %cst_17 = arith.constant 2.000000e-01 : f32
    %38 = vector.broadcast %cst_17 : f32 to vector<32x32xf32>
    %39 = arith.mulf %38, %35 : vector<32x32xf32>
    %40 = arith.select %37, %35, %39 : vector<32x32xi1>, vector<32x32xf32>
    %41 = arith.addf %40, %1 : vector<32x32xf32>
    %cst_18 = arith.constant dense<0xFF800000> : vector<32xf32>
    %42 = vector.multi_reduction <maximumf>, %41, %cst_18 [1] : vector<32x32xf32> to vector<32xf32>
    %43 = vector.shape_cast %42 : vector<32xf32> to vector<32x1xf32>
    %44 = vector.broadcast %43 : vector<32x1xf32> to vector<32x32xf32>
    %45 = arith.subf %41, %44 : vector<32x32xf32>
    %46 = math.exp %45 : vector<32x32xf32>
    %cst_19 = arith.constant dense<0.000000e+00> : vector<32xf32>
    %47 = vector.multi_reduction <add>, %46, %cst_19 [1] : vector<32x32xf32> to vector<32xf32>
    %48 = vector.shape_cast %47 : vector<32xf32> to vector<32x1xf32>
    %49 = vector.extract_strided_slice %3 {offsets = [0, 8], sizes = [32, 8], strides = [1, 1]} : vector<32x64xf32> to vector<32x8xf32>
    %cst_20 = arith.constant dense<0.000000e+00> : vector<32x8xf32>
    %50 = tpu.matmul %46, %49, %cst_20 {dimension_numbers = #tpu.dot_dimension_numbers<[1], [0], [0], [1], [0, 0, 1, 1], [], []>} : vector<32x32xf32>, vector<32x8xf32>, vector<32x8xf32> -> vector<32x8xf32>
    %51 = tpu.reciprocal %48 {approx = true} : vector<32x1xf32> -> vector<32x1xf32>
    %52 = vector.broadcast %51 : vector<32x1xf32> to vector<32x8xf32>
    %53 = arith.mulf %50, %52 : vector<32x8xf32>
    %54 = vector.extract_strided_slice %7 {offsets = [0, 2], sizes = [32, 1], strides = [1, 1]} : vector<32x8xf32> to vector<32x1xf32>
    %55 = vector.extract_strided_slice %5 {offsets = [2, 0], sizes = [1, 32], strides = [1, 1]} : vector<8x32xf32> to vector<1x32xf32>
    %56 = vector.broadcast %54 : vector<32x1xf32> to vector<32x32xf32>
    %57 = vector.broadcast %55 : vector<1x32xf32> to vector<32x32xf32>
    %58 = arith.addf %56, %57 : vector<32x32xf32>
    %cst_21 = arith.constant 0.000000e+00 : f32
    %59 = vector.broadcast %cst_21 : f32 to vector<32x32xf32>
    %60 = arith.cmpf ogt, %58, %59 : vector<32x32xf32>
    %cst_22 = arith.constant 2.000000e-01 : f32
    %61 = vector.broadcast %cst_22 : f32 to vector<32x32xf32>
    %62 = arith.mulf %61, %58 : vector<32x32xf32>
    %63 = arith.select %60, %58, %62 : vector<32x32xi1>, vector<32x32xf32>
    %64 = arith.addf %63, %1 : vector<32x32xf32>
    %cst_23 = arith.constant dense<0xFF800000> : vector<32xf32>
    %65 = vector.multi_reduction <maximumf>, %64, %cst_23 [1] : vector<32x32xf32> to vector<32xf32>
    %66 = vector.shape_cast %65 : vector<32xf32> to vector<32x1xf32>
    %67 = vector.broadcast %66 : vector<32x1xf32> to vector<32x32xf32>
    %68 = arith.subf %64, %67 : vector<32x32xf32>
    %69 = math.exp %68 : vector<32x32xf32>
    %cst_24 = arith.constant dense<0.000000e+00> : vector<32xf32>
    %70 = vector.multi_reduction <add>, %69, %cst_24 [1] : vector<32x32xf32> to vector<32xf32>
    %71 = vector.shape_cast %70 : vector<32xf32> to vector<32x1xf32>
    %72 = vector.extract_strided_slice %3 {offsets = [0, 16], sizes = [32, 8], strides = [1, 1]} : vector<32x64xf32> to vector<32x8xf32>
    %cst_25 = arith.constant dense<0.000000e+00> : vector<32x8xf32>
    %73 = tpu.matmul %69, %72, %cst_25 {dimension_numbers = #tpu.dot_dimension_numbers<[1], [0], [0], [1], [0, 0, 1, 1], [], []>} : vector<32x32xf32>, vector<32x8xf32>, vector<32x8xf32> -> vector<32x8xf32>
    %74 = tpu.reciprocal %71 {approx = true} : vector<32x1xf32> -> vector<32x1xf32>
    %75 = vector.broadcast %74 : vector<32x1xf32> to vector<32x8xf32>
    %76 = arith.mulf %73, %75 : vector<32x8xf32>
    %77 = vector.extract_strided_slice %7 {offsets = [0, 3], sizes = [32, 1], strides = [1, 1]} : vector<32x8xf32> to vector<32x1xf32>
    %78 = vector.extract_strided_slice %5 {offsets = [3, 0], sizes = [1, 32], strides = [1, 1]} : vector<8x32xf32> to vector<1x32xf32>
    %79 = vector.broadcast %77 : vector<32x1xf32> to vector<32x32xf32>
    %80 = vector.broadcast %78 : vector<1x32xf32> to vector<32x32xf32>
    %81 = arith.addf %79, %80 : vector<32x32xf32>
    %cst_26 = arith.constant 0.000000e+00 : f32
    %82 = vector.broadcast %cst_26 : f32 to vector<32x32xf32>
    %83 = arith.cmpf ogt, %81, %82 : vector<32x32xf32>
    %cst_27 = arith.constant 2.000000e-01 : f32
    %84 = vector.broadcast %cst_27 : f32 to vector<32x32xf32>
    %85 = arith.mulf %84, %81 : vector<32x32xf32>
    %86 = arith.select %83, %81, %85 : vector<32x32xi1>, vector<32x32xf32>
    %87 = arith.addf %86, %1 : vector<32x32xf32>
    %cst_28 = arith.constant dense<0xFF800000> : vector<32xf32>
    %88 = vector.multi_reduction <maximumf>, %87, %cst_28 [1] : vector<32x32xf32> to vector<32xf32>
    %89 = vector.shape_cast %88 : vector<32xf32> to vector<32x1xf32>
    %90 = vector.broadcast %89 : vector<32x1xf32> to vector<32x32xf32>
    %91 = arith.subf %87, %90 : vector<32x32xf32>
    %92 = math.exp %91 : vector<32x32xf32>
    %cst_29 = arith.constant dense<0.000000e+00> : vector<32xf32>
    %93 = vector.multi_reduction <add>, %92, %cst_29 [1] : vector<32x32xf32> to vector<32xf32>
    %94 = vector.shape_cast %93 : vector<32xf32> to vector<32x1xf32>
    %95 = vector.extract_strided_slice %3 {offsets = [0, 24], sizes = [32, 8], strides = [1, 1]} : vector<32x64xf32> to vector<32x8xf32>
    %cst_30 = arith.constant dense<0.000000e+00> : vector<32x8xf32>
    %96 = tpu.matmul %92, %95, %cst_30 {dimension_numbers = #tpu.dot_dimension_numbers<[1], [0], [0], [1], [0, 0, 1, 1], [], []>} : vector<32x32xf32>, vector<32x8xf32>, vector<32x8xf32> -> vector<32x8xf32>
    %97 = tpu.reciprocal %94 {approx = true} : vector<32x1xf32> -> vector<32x1xf32>
    %98 = vector.broadcast %97 : vector<32x1xf32> to vector<32x8xf32>
    %99 = arith.mulf %96, %98 : vector<32x8xf32>
    %100 = vector.extract_strided_slice %7 {offsets = [0, 4], sizes = [32, 1], strides = [1, 1]} : vector<32x8xf32> to vector<32x1xf32>
    %101 = vector.extract_strided_slice %5 {offsets = [4, 0], sizes = [1, 32], strides = [1, 1]} : vector<8x32xf32> to vector<1x32xf32>
    %102 = vector.broadcast %100 : vector<32x1xf32> to vector<32x32xf32>
    %103 = vector.broadcast %101 : vector<1x32xf32> to vector<32x32xf32>
    %104 = arith.addf %102, %103 : vector<32x32xf32>
    %cst_31 = arith.constant 0.000000e+00 : f32
    %105 = vector.broadcast %cst_31 : f32 to vector<32x32xf32>
    %106 = arith.cmpf ogt, %104, %105 : vector<32x32xf32>
    %cst_32 = arith.constant 2.000000e-01 : f32
    %107 = vector.broadcast %cst_32 : f32 to vector<32x32xf32>
    %108 = arith.mulf %107, %104 : vector<32x32xf32>
    %109 = arith.select %106, %104, %108 : vector<32x32xi1>, vector<32x32xf32>
    %110 = arith.addf %109, %1 : vector<32x32xf32>
    %cst_33 = arith.constant dense<0xFF800000> : vector<32xf32>
    %111 = vector.multi_reduction <maximumf>, %110, %cst_33 [1] : vector<32x32xf32> to vector<32xf32>
    %112 = vector.shape_cast %111 : vector<32xf32> to vector<32x1xf32>
    %113 = vector.broadcast %112 : vector<32x1xf32> to vector<32x32xf32>
    %114 = arith.subf %110, %113 : vector<32x32xf32>
    %115 = math.exp %114 : vector<32x32xf32>
    %cst_34 = arith.constant dense<0.000000e+00> : vector<32xf32>
    %116 = vector.multi_reduction <add>, %115, %cst_34 [1] : vector<32x32xf32> to vector<32xf32>
    %117 = vector.shape_cast %116 : vector<32xf32> to vector<32x1xf32>
    %118 = vector.extract_strided_slice %3 {offsets = [0, 32], sizes = [32, 8], strides = [1, 1]} : vector<32x64xf32> to vector<32x8xf32>
    %cst_35 = arith.constant dense<0.000000e+00> : vector<32x8xf32>
    %119 = tpu.matmul %115, %118, %cst_35 {dimension_numbers = #tpu.dot_dimension_numbers<[1], [0], [0], [1], [0, 0, 1, 1], [], []>} : vector<32x32xf32>, vector<32x8xf32>, vector<32x8xf32> -> vector<32x8xf32>
    %120 = tpu.reciprocal %117 {approx = true} : vector<32x1xf32> -> vector<32x1xf32>
    %121 = vector.broadcast %120 : vector<32x1xf32> to vector<32x8xf32>
    %122 = arith.mulf %119, %121 : vector<32x8xf32>
    %123 = vector.extract_strided_slice %7 {offsets = [0, 5], sizes = [32, 1], strides = [1, 1]} : vector<32x8xf32> to vector<32x1xf32>
    %124 = vector.extract_strided_slice %5 {offsets = [5, 0], sizes = [1, 32], strides = [1, 1]} : vector<8x32xf32> to vector<1x32xf32>
    %125 = vector.broadcast %123 : vector<32x1xf32> to vector<32x32xf32>
    %126 = vector.broadcast %124 : vector<1x32xf32> to vector<32x32xf32>
    %127 = arith.addf %125, %126 : vector<32x32xf32>
    %cst_36 = arith.constant 0.000000e+00 : f32
    %128 = vector.broadcast %cst_36 : f32 to vector<32x32xf32>
    %129 = arith.cmpf ogt, %127, %128 : vector<32x32xf32>
    %cst_37 = arith.constant 2.000000e-01 : f32
    %130 = vector.broadcast %cst_37 : f32 to vector<32x32xf32>
    %131 = arith.mulf %130, %127 : vector<32x32xf32>
    %132 = arith.select %129, %127, %131 : vector<32x32xi1>, vector<32x32xf32>
    %133 = arith.addf %132, %1 : vector<32x32xf32>
    %cst_38 = arith.constant dense<0xFF800000> : vector<32xf32>
    %134 = vector.multi_reduction <maximumf>, %133, %cst_38 [1] : vector<32x32xf32> to vector<32xf32>
    %135 = vector.shape_cast %134 : vector<32xf32> to vector<32x1xf32>
    %136 = vector.broadcast %135 : vector<32x1xf32> to vector<32x32xf32>
    %137 = arith.subf %133, %136 : vector<32x32xf32>
    %138 = math.exp %137 : vector<32x32xf32>
    %cst_39 = arith.constant dense<0.000000e+00> : vector<32xf32>
    %139 = vector.multi_reduction <add>, %138, %cst_39 [1] : vector<32x32xf32> to vector<32xf32>
    %140 = vector.shape_cast %139 : vector<32xf32> to vector<32x1xf32>
    %141 = vector.extract_strided_slice %3 {offsets = [0, 40], sizes = [32, 8], strides = [1, 1]} : vector<32x64xf32> to vector<32x8xf32>
    %cst_40 = arith.constant dense<0.000000e+00> : vector<32x8xf32>
    %142 = tpu.matmul %138, %141, %cst_40 {dimension_numbers = #tpu.dot_dimension_numbers<[1], [0], [0], [1], [0, 0, 1, 1], [], []>} : vector<32x32xf32>, vector<32x8xf32>, vector<32x8xf32> -> vector<32x8xf32>
    %143 = tpu.reciprocal %140 {approx = true} : vector<32x1xf32> -> vector<32x1xf32>
    %144 = vector.broadcast %143 : vector<32x1xf32> to vector<32x8xf32>
    %145 = arith.mulf %142, %144 : vector<32x8xf32>
    %146 = vector.extract_strided_slice %7 {offsets = [0, 6], sizes = [32, 1], strides = [1, 1]} : vector<32x8xf32> to vector<32x1xf32>
    %147 = vector.extract_strided_slice %5 {offsets = [6, 0], sizes = [1, 32], strides = [1, 1]} : vector<8x32xf32> to vector<1x32xf32>
    %148 = vector.broadcast %146 : vector<32x1xf32> to vector<32x32xf32>
    %149 = vector.broadcast %147 : vector<1x32xf32> to vector<32x32xf32>
    %150 = arith.addf %148, %149 : vector<32x32xf32>
    %cst_41 = arith.constant 0.000000e+00 : f32
    %151 = vector.broadcast %cst_41 : f32 to vector<32x32xf32>
    %152 = arith.cmpf ogt, %150, %151 : vector<32x32xf32>
    %cst_42 = arith.constant 2.000000e-01 : f32
    %153 = vector.broadcast %cst_42 : f32 to vector<32x32xf32>
    %154 = arith.mulf %153, %150 : vector<32x32xf32>
    %155 = arith.select %152, %150, %154 : vector<32x32xi1>, vector<32x32xf32>
    %156 = arith.addf %155, %1 : vector<32x32xf32>
    %cst_43 = arith.constant dense<0xFF800000> : vector<32xf32>
    %157 = vector.multi_reduction <maximumf>, %156, %cst_43 [1] : vector<32x32xf32> to vector<32xf32>
    %158 = vector.shape_cast %157 : vector<32xf32> to vector<32x1xf32>
    %159 = vector.broadcast %158 : vector<32x1xf32> to vector<32x32xf32>
    %160 = arith.subf %156, %159 : vector<32x32xf32>
    %161 = math.exp %160 : vector<32x32xf32>
    %cst_44 = arith.constant dense<0.000000e+00> : vector<32xf32>
    %162 = vector.multi_reduction <add>, %161, %cst_44 [1] : vector<32x32xf32> to vector<32xf32>
    %163 = vector.shape_cast %162 : vector<32xf32> to vector<32x1xf32>
    %164 = vector.extract_strided_slice %3 {offsets = [0, 48], sizes = [32, 8], strides = [1, 1]} : vector<32x64xf32> to vector<32x8xf32>
    %cst_45 = arith.constant dense<0.000000e+00> : vector<32x8xf32>
    %165 = tpu.matmul %161, %164, %cst_45 {dimension_numbers = #tpu.dot_dimension_numbers<[1], [0], [0], [1], [0, 0, 1, 1], [], []>} : vector<32x32xf32>, vector<32x8xf32>, vector<32x8xf32> -> vector<32x8xf32>
    %166 = tpu.reciprocal %163 {approx = true} : vector<32x1xf32> -> vector<32x1xf32>
    %167 = vector.broadcast %166 : vector<32x1xf32> to vector<32x8xf32>
    %168 = arith.mulf %165, %167 : vector<32x8xf32>
    %169 = vector.extract_strided_slice %7 {offsets = [0, 7], sizes = [32, 1], strides = [1, 1]} : vector<32x8xf32> to vector<32x1xf32>
    %170 = vector.extract_strided_slice %5 {offsets = [7, 0], sizes = [1, 32], strides = [1, 1]} : vector<8x32xf32> to vector<1x32xf32>
    %171 = vector.broadcast %169 : vector<32x1xf32> to vector<32x32xf32>
    %172 = vector.broadcast %170 : vector<1x32xf32> to vector<32x32xf32>
    %173 = arith.addf %171, %172 : vector<32x32xf32>
    %cst_46 = arith.constant 0.000000e+00 : f32
    %174 = vector.broadcast %cst_46 : f32 to vector<32x32xf32>
    %175 = arith.cmpf ogt, %173, %174 : vector<32x32xf32>
    %cst_47 = arith.constant 2.000000e-01 : f32
    %176 = vector.broadcast %cst_47 : f32 to vector<32x32xf32>
    %177 = arith.mulf %176, %173 : vector<32x32xf32>
    %178 = arith.select %175, %173, %177 : vector<32x32xi1>, vector<32x32xf32>
    %179 = arith.addf %178, %1 : vector<32x32xf32>
    %cst_48 = arith.constant dense<0xFF800000> : vector<32xf32>
    %180 = vector.multi_reduction <maximumf>, %179, %cst_48 [1] : vector<32x32xf32> to vector<32xf32>
    %181 = vector.shape_cast %180 : vector<32xf32> to vector<32x1xf32>
    %182 = vector.broadcast %181 : vector<32x1xf32> to vector<32x32xf32>
    %183 = arith.subf %179, %182 : vector<32x32xf32>
    %184 = math.exp %183 : vector<32x32xf32>
    %cst_49 = arith.constant dense<0.000000e+00> : vector<32xf32>
    %185 = vector.multi_reduction <add>, %184, %cst_49 [1] : vector<32x32xf32> to vector<32xf32>
    %186 = vector.shape_cast %185 : vector<32xf32> to vector<32x1xf32>
    %187 = vector.extract_strided_slice %3 {offsets = [0, 56], sizes = [32, 8], strides = [1, 1]} : vector<32x64xf32> to vector<32x8xf32>
    %cst_50 = arith.constant dense<0.000000e+00> : vector<32x8xf32>
    %188 = tpu.matmul %184, %187, %cst_50 {dimension_numbers = #tpu.dot_dimension_numbers<[1], [0], [0], [1], [0, 0, 1, 1], [], []>} : vector<32x32xf32>, vector<32x8xf32>, vector<32x8xf32> -> vector<32x8xf32>
    %189 = tpu.reciprocal %186 {approx = true} : vector<32x1xf32> -> vector<32x1xf32>
    %190 = vector.broadcast %189 : vector<32x1xf32> to vector<32x8xf32>
    %191 = arith.mulf %188, %190 : vector<32x8xf32>
    %192 = tpu.concatenate %30, %53, %76, %99, %122, %145, %168, %191 in 1 : vector<32x8xf32>, vector<32x8xf32>, vector<32x8xf32>, vector<32x8xf32>, vector<32x8xf32>, vector<32x8xf32>, vector<32x8xf32>, vector<32x8xf32> -> vector<32x64xf32>
    %c0_51 = arith.constant 0 : index
    %c0_52 = arith.constant 0 : index
    %193 = vector.load %arg5[%c0_51, %c0_52] : memref<1x64xf32, #tpu.memory_space<vmem>>, vector<1x64xf32>
    %194 = vector.broadcast %193 : vector<1x64xf32> to vector<32x64xf32>
    %195 = arith.addf %192, %194 : vector<32x64xf32>
    %cst_53 = arith.constant 0.000000e+00 : f32
    %196 = vector.broadcast %cst_53 : f32 to vector<32x64xf32>
    %197 = arith.cmpf ogt, %195, %196 : vector<32x64xf32>
    %198 = math.exp %195 : vector<32x64xf32>
    %cst_54 = arith.constant 1.000000e+00 : f32
    %199 = vector.broadcast %cst_54 : f32 to vector<32x64xf32>
    %200 = arith.subf %198, %199 : vector<32x64xf32>
    %201 = arith.select %197, %195, %200 : vector<32x64xi1>, vector<32x64xf32>
    %c0_55 = arith.constant 0 : index
    %c0_56 = arith.constant 0 : index
    %202 = vector.load %arg6[%c0_55, %c0_56] : memref<64x4xf32, #tpu.memory_space<vmem>>, vector<64x4xf32>
    %cst_57 = arith.constant dense<0.000000e+00> : vector<32x4xf32>
    %203 = tpu.matmul %201, %202, %cst_57 {dimension_numbers = #tpu.dot_dimension_numbers<[1], [0], [0], [1], [0, 0, 1, 1], [], []>} : vector<32x64xf32>, vector<64x4xf32>, vector<32x4xf32> -> vector<32x4xf32>
    %c0_58 = arith.constant 0 : index
    %c0_59 = arith.constant 0 : index
    %204 = vector.load %arg7[%c0_58, %c0_59] : memref<1x64xf32, #tpu.memory_space<vmem>>, vector<1x64xf32>
    %cst_60 = arith.constant dense<0.000000e+00> : vector<1x32xf32>
    %205 = tpu.matmul %204, %201, %cst_60 {dimension_numbers = #tpu.dot_dimension_numbers<[1], [1], [0], [0], [0, 0, 1, 0], [], []>} : vector<1x64xf32>, vector<32x64xf32>, vector<1x32xf32> -> vector<1x32xf32>
    %c0_61 = arith.constant 0 : index
    %c0_62 = arith.constant 0 : index
    %206 = vector.load %arg8[%c0_61, %c0_62] : memref<64x1xf32, #tpu.memory_space<vmem>>, vector<64x1xf32>
    %cst_63 = arith.constant dense<0.000000e+00> : vector<32x1xf32>
    %207 = tpu.matmul %201, %206, %cst_63 {dimension_numbers = #tpu.dot_dimension_numbers<[1], [0], [0], [1], [0, 0, 1, 1], [], []>} : vector<32x64xf32>, vector<64x1xf32>, vector<32x1xf32> -> vector<32x1xf32>
    %208 = vector.broadcast %207 : vector<32x1xf32> to vector<32x32xf32>
    %209 = vector.broadcast %205 : vector<1x32xf32> to vector<32x32xf32>
    %210 = arith.addf %208, %209 : vector<32x32xf32>
    %cst_64 = arith.constant 0.000000e+00 : f32
    %211 = vector.broadcast %cst_64 : f32 to vector<32x32xf32>
    %212 = arith.cmpf ogt, %210, %211 : vector<32x32xf32>
    %cst_65 = arith.constant 2.000000e-01 : f32
    %213 = vector.broadcast %cst_65 : f32 to vector<32x32xf32>
    %214 = arith.mulf %213, %210 : vector<32x32xf32>
    %215 = arith.select %212, %210, %214 : vector<32x32xi1>, vector<32x32xf32>
    %216 = arith.addf %215, %1 : vector<32x32xf32>
    %cst_66 = arith.constant dense<0xFF800000> : vector<32xf32>
    %217 = vector.multi_reduction <maximumf>, %216, %cst_66 [1] : vector<32x32xf32> to vector<32xf32>
    %218 = vector.shape_cast %217 : vector<32xf32> to vector<32x1xf32>
    %219 = vector.broadcast %218 : vector<32x1xf32> to vector<32x32xf32>
    %220 = arith.subf %216, %219 : vector<32x32xf32>
    %221 = math.exp %220 : vector<32x32xf32>
    %cst_67 = arith.constant dense<0.000000e+00> : vector<32xf32>
    %222 = vector.multi_reduction <add>, %221, %cst_67 [1] : vector<32x32xf32> to vector<32xf32>
    %223 = vector.shape_cast %222 : vector<32xf32> to vector<32x1xf32>
    %cst_68 = arith.constant dense<0.000000e+00> : vector<32x4xf32>
    %224 = tpu.matmul %221, %203, %cst_68 {dimension_numbers = #tpu.dot_dimension_numbers<[1], [0], [0], [1], [0, 0, 1, 1], [], []>} : vector<32x32xf32>, vector<32x4xf32>, vector<32x4xf32> -> vector<32x4xf32>
    %225 = tpu.reciprocal %223 {approx = true} : vector<32x1xf32> -> vector<32x1xf32>
    %226 = vector.broadcast %225 : vector<32x1xf32> to vector<32x4xf32>
    %227 = arith.mulf %224, %226 : vector<32x4xf32>
    %c0_69 = arith.constant 0 : index
    %c0_70 = arith.constant 0 : index
    %228 = vector.load %arg9[%c0_69, %c0_70] : memref<1x4xf32, #tpu.memory_space<vmem>>, vector<1x4xf32>
    %229 = vector.broadcast %228 : vector<1x4xf32> to vector<32x4xf32>
    %230 = arith.addf %227, %229 : vector<32x4xf32>
    %cst_71 = arith.constant dense<0xFF800000> : vector<32xf32>
    %231 = vector.multi_reduction <maximumf>, %230, %cst_71 [1] : vector<32x4xf32> to vector<32xf32>
    %232 = vector.shape_cast %231 : vector<32xf32> to vector<32x1xf32>
    %233 = vector.broadcast %232 : vector<32x1xf32> to vector<32x4xf32>
    %234 = arith.subf %230, %233 : vector<32x4xf32>
    %235 = math.exp %234 : vector<32x4xf32>
    %cst_72 = arith.constant dense<0.000000e+00> : vector<32xf32>
    %236 = vector.multi_reduction <add>, %235, %cst_72 [1] : vector<32x4xf32> to vector<32xf32>
    %237 = vector.shape_cast %236 : vector<32xf32> to vector<32x1xf32>
    %238 = math.log %237 : vector<32x1xf32>
    %239 = arith.addf %238, %232 : vector<32x1xf32>
    %240 = vector.broadcast %239 : vector<32x1xf32> to vector<32x4xf32>
    %241 = arith.subf %230, %240 : vector<32x4xf32>
    %c0_73 = arith.constant 0 : index
    %c0_74 = arith.constant 0 : index
    %242 = vector.load %arg10[%c0_73, %c0_74] : memref<32x4xf32, #tpu.memory_space<vmem>>, vector<32x4xf32>
    tpu.vector_store %arg10[%c0_73, %c0_74], %241 {strides = array<i32>} : memref<32x4xf32, #tpu.memory_space<vmem>>, vector<32x4xf32>,
    return
  }
}

</mosaic_0001>

<llo_original>
// kernel: net_forward.1
$region0: #{net_forward.1}
  #allocation0 [shape = 'u32[]', space=smem, size = 0x4, offset = 0x4, fixed_abs, tag = 'smem constant byte address 0x4 - core index']
  #allocation1 [shape = 'u32[144,128]{1,0:T(1,128)}', space=vmem, size = 0x12000, scoped, tag = 'internal scratch']
  %s0 = inlined_call_operand.vmem [shape: f32[32,16], index: 0, kind: input, shape index: {}]
  %s1 = inlined_call_operand.vmem [shape: f32[32,32], index: 1, kind: input, shape index: {}]
  %s2 = inlined_call_operand.vmem [shape: f32[16,64], index: 2, kind: input, shape index: {}]
  %s3 = inlined_call_operand.vmem [shape: f32[8,16], index: 3, kind: input, shape index: {}]
  %s4 = inlined_call_operand.vmem [shape: f32[16,8], index: 4, kind: input, shape index: {}]
  %s5 = inlined_call_operand.vmem [shape: f32[1,64], index: 5, kind: input, shape index: {}]
  %s6 = inlined_call_operand.vmem [shape: f32[64,4], index: 6, kind: input, shape index: {}]
  %s7 = inlined_call_operand.vmem [shape: f32[1,64], index: 7, kind: input, shape index: {}]
  %s8 = inlined_call_operand.vmem [shape: f32[64,1], index: 8, kind: input, shape index: {}]
  %s9 = inlined_call_operand.vmem [shape: f32[1,4], index: 9, kind: input, shape index: {}]
  %s10 = inlined_call_operand.vmem [shape: f32[32,4], index: 10, kind: output, shape index: {}]
  %s11 = sld [smem:[#allocation0]]
  $region50: #{net_forward.1} parent=0
    _
  %s13 = ssub.s32 1, %s11
  %s14 = scalar_select 0, %s13, %s11
  // Predicated region
  $region2: #{net_forward.1} parent=0 // pred_check
    _
  $region3: #{net_forward.1} parent=0 // pred_check_branch
    %16 = sbr.rel (0) target = $region5
  $region4: #{net_forward.1} parent=0 // pred_region
    _
  $region5: #{net_forward.1} parent=0 // pred_fallthru
    _
  // Predicated region
  $region6: #{net_forward.1} parent=0 // pred_check
    _
  $region7: #{net_forward.1} parent=0 // pred_check_branch
    %18 = sbr.rel (0) target = $region9
  $region8: #{net_forward.1} parent=0 // pred_region
    _
  $region9: #{net_forward.1} parent=0 // pred_fallthru
    _
  // Predicated region
  $region10: #{net_forward.1} parent=0 // pred_check
    _
  $region11: #{net_forward.1} parent=0 // pred_check_branch
    %20 = sbr.rel (0) target = $region13
  $region12: #{net_forward.1} parent=0 // pred_region
    _
  $region13: #{net_forward.1} parent=0 // pred_fallthru
    _
  // Predicated region
  $region14: #{net_forward.1} parent=0 // pred_check
    _
  $region15: #{net_forward.1} parent=0 // pred_check_branch
    %22 = sbr.rel (0) target = $region17
  $region16: #{net_forward.1} parent=0 // pred_region
    _
  $region17: #{net_forward.1} parent=0 // pred_fallthru
    _
  // Predicated region
  $region18: #{net_forward.1} parent=0 // pred_check
    _
  $region19: #{net_forward.1} parent=0 // pred_check_branch
    %24 = sbr.rel (0) target = $region21
  $region20: #{net_forward.1} parent=0 // pred_region
    _
  $region21: #{net_forward.1} parent=0 // pred_fallthru
    _
  // Predicated region
  $region22: #{net_forward.1} parent=0 // pred_check
    _
  $region23: #{net_forward.1} parent=0 // pred_check_branch
    %26 = sbr.rel (0) target = $region25
  $region24: #{net_forward.1} parent=0 // pred_region
    _
  $region25: #{net_forward.1} parent=0 // pred_fallthru
    _
  // Predicated region
  $region26: #{net_forward.1} parent=0 // pred_check
    _
  $region27: #{net_forward.1} parent=0 // pred_check_branch
    %28 = sbr.rel (0) target = $region29
  $region28: #{net_forward.1} parent=0 // pred_region
    _
  $region29: #{net_forward.1} parent=0 // pred_fallthru
    _
  // Predicated region
  $region30: #{net_forward.1} parent=0 // pred_check
    _
  $region31: #{net_forward.1} parent=0 // pred_check_branch
    %30 = sbr.rel (0) target = $region33
  $region32: #{net_forward.1} parent=0 // pred_region
    _
  $region33: #{net_forward.1} parent=0 // pred_fallthru
    _
  // Predicated region
  $region34: #{net_forward.1} parent=0 // pred_check
    _
  $region35: #{net_forward.1} parent=0 // pred_check_branch
    %32 = sbr.rel (0) target = $region37
  $region36: #{net_forward.1} parent=0 // pred_region
    _
  $region37: #{net_forward.1} parent=0 // pred_fallthru
    _
  // Predicated region
  $region38: #{net_forward.1} parent=0 // pred_check
    _
  $region39: #{net_forward.1} parent=0 // pred_check_branch
    %34 = sbr.rel (0) target = $region41
  $region40: #{net_forward.1} parent=0 // pred_region
    _
  $region41: #{net_forward.1} parent=0 // pred_fallthru
    _
  %v35 = vld [vmem:[%s0] sm:$0xff]
  %v36 = vld [vmem:[%s0 + $0x8] sm:$0xff]
  %v37 = vld [vmem:[%s0 + $0x10] sm:$0xff]
  %v38 = vld [vmem:[%s0 + $0x18] sm:$0xff]
  %v39 = vld [vmem:[%s1] sm:$0xff]
  %v40 = vld [vmem:[%s1 + $0x8] sm:$0xff]
  %v41 = vld [vmem:[%s1 + $0x10] sm:$0xff]
  %v42 = vld [vmem:[%s1 + $0x18] sm:$0xff]
  %v43 = vld [vmem:[%s2] sm:$0xff]
  %v44 = vld [vmem:[%s2 + $0x8] sm:$0xff]
  %vm45 = vcmask 130048
  %v47 = vsel %vm45, %v35, 0
  %v50 = vsel %vm45, %v36, 0
  %v53 = vsel %vm45, %v37, 0
  %v56 = vsel %vm45, %v38, 0
  %58 = vmatprep.subr.mxu0 0.0
  %59 = vmatpush1.msra.mxu0 0.0
  %60 = vmatprep.subr.mxu0 0.0
  %61 = vmatpush1.msra.mxu0 0.0
  %62 = vmatprep.subr.mxu0 0.0
  %63 = vmatpush1.msra.mxu0 0.0
  %64 = vmatprep.subr.mxu0 0.0
  %65 = vmatpush1.msra.mxu0 0.0
  %66 = vmatprep.subr.mxu0 0.0
  %67 = vmatpush1.msra.mxu0 0.0
  %68 = vmatprep.subr.mxu0 0.0
  %69 = vmatpush1.msra.mxu0 0.0
  %70 = vmatprep.subr.mxu0 0.0
  %71 = vmatpush1.msra.mxu0 0.0
  %72 = vmatprep.subr.mxu0 0.0
  %73 = vmatpush1.msra.mxu0 0.0
  %74 = vmatprep.subr.mxu0 0.0
  %75 = vmatpush1.msra.mxu0 0.0
  %76 = vmatprep.subr.mxu0 0.0
  %77 = vmatpush1.msra.mxu0 0.0
  %78 = vmatprep.subr.mxu0 0.0
  %79 = vmatpush1.msra.mxu0 0.0
  %80 = vmatprep.subr.mxu0 0.0
  %81 = vmatpush1.msra.mxu0 0.0
  %82 = vmatprep.subr.mxu0 0.0
  %83 = vmatpush1.msra.mxu0 0.0
  %84 = vmatprep.subr.mxu0 0.0
  %85 = vmatpush1.msra.mxu0 0.0
  %86 = vmatprep.subr.mxu0 0.0
  %87 = vmatpush1.msra.mxu0 %v44
  %88 = vmatprep.subr.mxu0 0.0
  %89 = vmatpush1.msra.mxu0 %v43
  %90 = vmatprep.subr.mxu0 0.0
  %91 = vmatpush2.msra.mxu0 0.0
  %92 = vmatprep.subr.mxu0 0.0
  %93 = vmatpush2.msra.mxu0 0.0
  %94 = vmatprep.subr.mxu0 0.0
  %95 = vmatpush2.msra.mxu0 0.0
  %96 = vmatprep.subr.mxu0 0.0
  %97 = vmatpush2.msra.mxu0 0.0
  %98 = vmatprep.subr.mxu0 0.0
  %99 = vmatpush2.msra.mxu0 0.0
  %100 = vmatprep.subr.mxu0 0.0
  %101 = vmatpush2.msra.mxu0 0.0
  %102 = vmatprep.subr.mxu0 0.0
  %103 = vmatpush2.msra.mxu0 0.0
  %104 = vmatprep.subr.mxu0 0.0
  %105 = vmatpush2.msra.mxu0 0.0
  %106 = vmatprep.subr.mxu0 0.0
  %107 = vmatpush2.msra.mxu0 0.0
  %108 = vmatprep.subr.mxu0 0.0
  %109 = vmatpush2.msra.mxu0 0.0
  %110 = vmatprep.subr.mxu0 0.0
  %111 = vmatpush2.msra.mxu0 0.0
  %112 = vmatprep.subr.mxu0 0.0
  %113 = vmatpush2.msra.mxu0 0.0
  %114 = vmatprep.subr.mxu0 0.0
  %115 = vmatpush2.msra.mxu0 0.0
  %116 = vmatprep.subr.mxu0 0.0
  %117 = vmatpush2.msra.mxu0 0.0
  %118 = vmatprep.subr.mxu0 0.0
  %119 = vmatpush2.msra.mxu0 0.0
  %120 = vmatprep.subr.mxu0 0.0
  %121 = vmatpush2.msra.mxu0 0.0
  %122 = vmatprep.mubr.f32.mxu0 0.0
  %123 = vmatmul.mubr.f32.gmra.mxu0 %v47
  %v124 = vpop.f32.mrf.mxu0
  %v125 = vadd.f32 0.0, %v124
  %v126 = vpop.f32.mrf.mxu0
  %127 = vmatprep.mubr.f32.mxu0 0.0
  %128 = vmatmul.mubr.f32.gmra.mxu0 %v50
  %v129 = vpop.f32.mrf.mxu0
  %v130 = vadd.f32 0.0, %v129
  %v131 = vpop.f32.mrf.mxu0
  %132 = vmatprep.mubr.f32.mxu0 0.0
  %133 = vmatmul.mubr.f32.gmra.mxu0 %v53
  %v134 = vpop.f32.mrf.mxu0
  %v135 = vadd.f32 0.0, %v134
  %v136 = vpop.f32.mrf.mxu0
  %137 = vmatprep.mubr.f32.mxu0 0.0
  %138 = vmatmul.mubr.f32.gmra.mxu0 %v56
  %v139 = vpop.f32.mrf.mxu0
  %v140 = vadd.f32 0.0, %v139
  %v141 = vpop.f32.mrf.mxu0
  %142 = vdwg.mxu0
  %v143 = vld [vmem:[%s3] sm:$0xff]
  %v145 = vsel %vm45, %v143, 0
  %147 = vmatprep.subr.mxu0 0.0
  %148 = vmatpush1.xpose.msra.mxu0 0.0
  %149 = vmatprep.subr.mxu0 0.0
  %150 = vmatpush1.xpose.msra.mxu0 0.0
  %151 = vmatprep.subr.mxu0 0.0
  %152 = vmatpush1.xpose.msra.mxu0 0.0
  %153 = vmatprep.subr.mxu0 0.0
  %154 = vmatpush1.xpose.msra.mxu0 0.0
  %155 = vmatprep.subr.mxu0 0.0
  %156 = vmatpush1.xpose.msra.mxu0 0.0
  %157 = vmatprep.subr.mxu0 0.0
  %158 = vmatpush1.xpose.msra.mxu0 0.0
  %159 = vmatprep.subr.mxu0 0.0
  %160 = vmatpush1.xpose.msra.mxu0 0.0
  %161 = vmatprep.subr.mxu0 0.0
  %162 = vmatpush1.xpose.msra.mxu0 0.0
  %163 = vmatprep.subr.mxu0 0.0
  %164 = vmatpush1.xpose.msra.mxu0 0.0
  %165 = vmatprep.subr.mxu0 0.0
  %166 = vmatpush1.xpose.msra.mxu0 0.0
  %167 = vmatprep.subr.mxu0 0.0
  %168 = vmatpush1.xpose.msra.mxu0 0.0
  %169 = vmatprep.subr.mxu0 0.0
  %170 = vmatpush1.xpose.msra.mxu0 0.0
  %171 = vmatprep.subr.mxu0 0.0
  %172 = vmatpush1.xpose.msra.mxu0 %v56
  %173 = vmatprep.subr.mxu0 0.0
  %174 = vmatpush1.xpose.msra.mxu0 %v53
  %175 = vmatprep.subr.mxu0 0.0
  %176 = vmatpush1.xpose.msra.mxu0 %v50
  %177 = vmatprep.subr.mxu0 0.0
  %178 = vmatpush1.xpose.msra.mxu0 %v47
  %179 = vmatprep.subr.mxu0 0.0
  %180 = vmatpush2.xpose.msra.mxu0 0.0
  %181 = vmatprep.subr.mxu0 0.0
  %182 = vmatpush2.xpose.msra.mxu0 0.0
  %183 = vmatprep.subr.mxu0 0.0
  %184 = vmatpush2.xpose.msra.mxu0 0.0
  %185 = vmatprep.subr.mxu0 0.0
  %186 = vmatpush2.xpose.msra.mxu0 0.0
  %187 = vmatprep.subr.mxu0 0.0
  %188 = vmatpush2.xpose.msra.mxu0 0.0
  %189 = vmatprep.subr.mxu0 0.0
  %190 = vmatpush2.xpose.msra.mxu0 0.0
  %191 = vmatprep.subr.mxu0 0.0
  %192 = vmatpush2.xpose.msra.mxu0 0.0
  %193 = vmatprep.subr.mxu0 0.0
  %194 = vmatpush2.xpose.msra.mxu0 0.0
  %195 = vmatprep.subr.mxu0 0.0
  %196 = vmatpush2.xpose.msra.mxu0 0.0
  %197 = vmatprep.subr.mxu0 0.0
  %198 = vmatpush2.xpose.msra.mxu0 0.0
  %199 = vmatprep.subr.mxu0 0.0
  %200 = vmatpush2.xpose.msra.mxu0 0.0
  %201 = vmatprep.subr.mxu0 0.0
  %202 = vmatpush2.xpose.msra.mxu0 0.0
  %203 = vmatprep.subr.mxu0 0.0
  %204 = vmatpush2.xpose.msra.mxu0 0.0
  %205 = vmatprep.subr.mxu0 0.0
  %206 = vmatpush2.xpose.msra.mxu0 0.0
  %207 = vmatprep.subr.mxu0 0.0
  %208 = vmatpush2.xpose.msra.mxu0 0.0
  %209 = vmatprep.subr.mxu0 0.0
  %210 = vmatpush2.xpose.msra.mxu0 0.0
  %211 = vmatprep.mubr.f32.mxu0 0.0
  %212 = vmatmul.mubr.f32.gmra.mxu0 %v145
  %v213 = vpop.f32.mrf.mxu0
  %v214 = vadd.f32 0.0, %v213
  %v215 = vpop.f32.mrf.mxu0
  %216 = vdwg.mxu0
  %v217 = vld [vmem:[%s4] sm:$0xff]
  %v218 = vld [vmem:[%s4 + $0x8] sm:$0xff]
  %219 = vmatprep.subr.mxu0 0.0
  %220 = vmatpush1.msra.mxu0 0.0
  %221 = vmatprep.subr.mxu0 0.0
  %222 = vmatpush1.msra.mxu0 0.0
  %223 = vmatprep.subr.mxu0 0.0
  %224 = vmatpush1.msra.mxu0 0.0
  %225 = vmatprep.subr.mxu0 0.0
  %226 = vmatpush1.msra.mxu0 0.0
  %227 = vmatprep.subr.mxu0 0.0
  %228 = vmatpush1.msra.mxu0 0.0
  %229 = vmatprep.subr.mxu0 0.0
  %230 = vmatpush1.msra.mxu0 0.0
  %231 = vmatprep.subr.mxu0 0.0
  %232 = vmatpush1.msra.mxu0 0.0
  %233 = vmatprep.subr.mxu0 0.0
  %234 = vmatpush1.msra.mxu0 0.0
  %235 = vmatprep.subr.mxu0 0.0
  %236 = vmatpush1.msra.mxu0 0.0
  %237 = vmatprep.subr.mxu0 0.0
  %238 = vmatpush1.msra.mxu0 0.0
  %239 = vmatprep.subr.mxu0 0.0
  %240 = vmatpush1.msra.mxu0 0.0
  %241 = vmatprep.subr.mxu0 0.0
  %242 = vmatpush1.msra.mxu0 0.0
  %243 = vmatprep.subr.mxu0 0.0
  %244 = vmatpush1.msra.mxu0 0.0
  %245 = vmatprep.subr.mxu0 0.0
  %246 = vmatpush1.msra.mxu0 0.0
  %247 = vmatprep.subr.mxu0 0.0
  %248 = vmatpush1.msra.mxu0 %v218
  %249 = vmatprep.subr.mxu0 0.0
  %250 = vmatpush1.msra.mxu0 %v217
  %251 = vmatprep.subr.mxu0 0.0
  %252 = vmatpush2.msra.mxu0 0.0
  %253 = vmatprep.subr.mxu0 0.0
  %254 = vmatpush2.msra.mxu0 0.0
  %255 = vmatprep.subr.mxu0 0.0
  %256 = vmatpush2.msra.mxu0 0.0
  %257 = vmatprep.subr.mxu0 0.0
  %258 = vmatpush2.msra.mxu0 0.0
  %259 = vmatprep.subr.mxu0 0.0
  %260 = vmatpush2.msra.mxu0 0.0
  %261 = vmatprep.subr.mxu0 0.0
  %262 = vmatpush2.msra.mxu0 0.0
  %263 = vmatprep.subr.mxu0 0.0
  %264 = vmatpush2.msra.mxu0 0.0
  %265 = vmatprep.subr.mxu0 0.0
  %266 = vmatpush2.msra.mxu0 0.0
  %267 = vmatprep.subr.mxu0 0.0
  %268 = vmatpush2.msra.mxu0 0.0
  %269 = vmatprep.subr.mxu0 0.0
  %270 = vmatpush2.msra.mxu0 0.0
  %271 = vmatprep.subr.mxu0 0.0
  %272 = vmatpush2.msra.mxu0 0.0
  %273 = vmatprep.subr.mxu0 0.0
  %274 = vmatpush2.msra.mxu0 0.0
  %275 = vmatprep.subr.mxu0 0.0
  %276 = vmatpush2.msra.mxu0 0.0
  %277 = vmatprep.subr.mxu0 0.0
  %278 = vmatpush2.msra.mxu0 0.0
  %279 = vmatprep.subr.mxu0 0.0
  %280 = vmatpush2.msra.mxu0 0.0
  %281 = vmatprep.subr.mxu0 0.0
  %282 = vmatpush2.msra.mxu0 0.0
  %283 = vmatprep.mubr.f32.mxu0 0.0
  %284 = vmatmul.mubr.f32.gmra.mxu0 %v47
  %v285 = vpop.f32.mrf.mxu0
  %v286 = vadd.f32 0.0, %v285
  %v287 = vpop.f32.mrf.mxu0
  %288 = vmatprep.mubr.f32.mxu0 0.0
  %289 = vmatmul.mubr.f32.gmra.mxu0 %v50
  %v290 = vpop.f32.mrf.mxu0
  %v291 = vadd.f32 0.0, %v290
  %v292 = vpop.f32.mrf.mxu0
  %293 = vmatprep.mubr.f32.mxu0 0.0
  %294 = vmatmul.mubr.f32.gmra.mxu0 %v53
  %v295 = vpop.f32.mrf.mxu0
  %v296 = vadd.f32 0.0, %v295
  %v297 = vpop.f32.mrf.mxu0
  %298 = vmatprep.mubr.f32.mxu0 0.0
  %299 = vmatmul.mubr.f32.gmra.mxu0 %v56
  %v300 = vpop.f32.mrf.mxu0
  %v301 = vadd.f32 0.0, %v300
  %v302 = vpop.f32.mrf.mxu0
  %303 = vdwg.mxu0
  %305 = vset.pattern.permute.xlu0 0
  %306 = vperm.xlu0 %305, %v286
  %v307 = vpop.permute.xlu0 %306
  %310 = vset.pattern.permute.xlu0 0
  %311 = vperm.xlu0 %310, %v291
  %v312 = vpop.permute.xlu0 %311
  %315 = vset.pattern.permute.xlu0 0
  %316 = vperm.xlu0 %315, %v296
  %v317 = vpop.permute.xlu0 %316
  %320 = vset.pattern.permute.xlu0 0
  %321 = vperm.xlu0 %320, %v301
  %v322 = vpop.permute.xlu0 %321
  %v324 = vlaneseq
  %v325 = vshrl.u32 %v324, 7
  %v326 = vsub.s32 0, %v325
  %v327 = vrot.slane %v214, %v326
  %v328 = vadd.f32 %v307, %v327
  %v329 = vadd.f32 %v312, %v327
  %v330 = vadd.f32 %v317, %v327
  %v331 = vadd.f32 %v322, %v327
  %vm332 = vcmp.gt.f32.partialorder %v328, 0.0
  %vm333 = vcmp.gt.f32.partialorder %v329, 0.0
  %vm334 = vcmp.gt.f32.partialorder %v330, 0.0
  %vm335 = vcmp.gt.f32.partialorder %v331, 0.0
  %v336 = vmul.f32 %v328, 0.2
  %v337 = vmul.f32 %v329, 0.2
  %v338 = vmul.f32 %v330, 0.2
  %v339 = vmul.f32 %v331, 0.2
  %v340 = vsel %vm332, %v328, %v336
  %v341 = vsel %vm333, %v329, %v337
  %v342 = vsel %vm334, %v330, %v338
  %v343 = vsel %vm335, %v331, %v339
  %v344 = vadd.f32 %v340, %v39
  %v345 = vadd.f32 %v341, %v40
  %v346 = vadd.f32 %v342, %v41
  %v347 = vadd.f32 %v343, %v42
  %vm348 = vcmask 261120
  %v349 = vsel %vm348, %v344, -inf
  %350 = vmax.xlane.f32.xlu0 %v349
  %v351 = vpop.xlane.xlu0 %350
  %v352 = vsel %vm348, %v345, -inf
  %353 = vmax.xlane.f32.xlu0 %v352
  %v354 = vpop.xlane.xlu0 %353
  %v355 = vsel %vm348, %v346, -inf
  %356 = vmax.xlane.f32.xlu0 %v355
  %v357 = vpop.xlane.xlu0 %356
  %v358 = vsel %vm348, %v347, -inf
  %359 = vmax.xlane.f32.xlu0 %v358
  %v360 = vpop.xlane.xlu0 %359
  %v361 = vsub.f32 %v344, %v351
  %v362 = vsub.f32 %v345, %v354
  %v363 = vsub.f32 %v346, %v357
  %v364 = vsub.f32 %v347, %v360
  %v365 = vmul.f32 %v361, 1.442695
  %v366 = vpow.pop %v365
  %v367 = vmul.f32 %v362, 1.442695
  %v368 = vpow.pop %v367
  %v369 = vmul.f32 %v363, 1.442695
  %v370 = vpow.pop %v369
  %v371 = vmul.f32 %v364, 1.442695
  %v372 = vpow.pop %v371
  %v373 = vsel %vm348, %v366, 0.0
  %374 = vadd.xlane.f32.xlu0 %v373
  %v375 = vpop.xlane.xlu0 %374
  %v376 = vsel %vm348, %v368, 0.0
  %377 = vadd.xlane.f32.xlu0 %v376
  %v378 = vpop.xlane.xlu0 %377
  %v379 = vsel %vm348, %v370, 0.0
  %380 = vadd.xlane.f32.xlu0 %v379
  %v381 = vpop.xlane.xlu0 %380
  %v382 = vsel %vm348, %v372, 0.0
  %383 = vadd.xlane.f32.xlu0 %v382
  %v384 = vpop.xlane.xlu0 %383
  %v386 = vsel %vm348, %v366, 0
  %v389 = vsel %vm348, %v368, 0
  %v392 = vsel %vm348, %v370, 0
  %v395 = vsel %vm348, %v372, 0
  %397 = vmatprep.subr.mxu0 0.0
  %398 = vmatpush1.msra.mxu0 0.0
  %399 = vmatprep.subr.mxu0 0.0
  %400 = vmatpush1.msra.mxu0 0.0
  %401 = vmatprep.subr.mxu0 0.0
  %402 = vmatpush1.msra.mxu0 0.0
  %403 = vmatprep.subr.mxu0 0.0
  %404 = vmatpush1.msra.mxu0 0.0
  %405 = vmatprep.subr.mxu0 0.0
  %406 = vmatpush1.msra.mxu0 0.0
  %407 = vmatprep.subr.mxu0 0.0
  %408 = vmatpush1.msra.mxu0 0.0
  %409 = vmatprep.subr.mxu0 0.0
  %410 = vmatpush1.msra.mxu0 0.0
  %411 = vmatprep.subr.mxu0 0.0
  %412 = vmatpush1.msra.mxu0 0.0
  %413 = vmatprep.subr.mxu0 0.0
  %414 = vmatpush1.msra.mxu0 0.0
  %415 = vmatprep.subr.mxu0 0.0
  %416 = vmatpush1.msra.mxu0 0.0
  %417 = vmatprep.subr.mxu0 0.0
  %418 = vmatpush1.msra.mxu0 0.0
  %419 = vmatprep.subr.mxu0 0.0
  %420 = vmatpush1.msra.mxu0 0.0
  %421 = vmatprep.subr.mxu0 0.0
  %422 = vmatpush1.msra.mxu0 %v140
  %423 = vmatprep.subr.mxu0 0.0
  %424 = vmatpush1.msra.mxu0 %v135
  %425 = vmatprep.subr.mxu0 0.0
  %426 = vmatpush1.msra.mxu0 %v130
  %427 = vmatprep.subr.mxu0 0.0
  %428 = vmatpush1.msra.mxu0 %v125
  %429 = vmatprep.subr.mxu0 0.0
  %430 = vmatpush2.msra.mxu0 0.0
  %431 = vmatprep.subr.mxu0 0.0
  %432 = vmatpush2.msra.mxu0 0.0
  %433 = vmatprep.subr.mxu0 0.0
  %434 = vmatpush2.msra.mxu0 0.0
  %435 = vmatprep.subr.mxu0 0.0
  %436 = vmatpush2.msra.mxu0 0.0
  %437 = vmatprep.subr.mxu0 0.0
  %438 = vmatpush2.msra.mxu0 0.0
  %439 = vmatprep.subr.mxu0 0.0
  %440 = vmatpush2.msra.mxu0 0.0
  %441 = vmatprep.subr.mxu0 0.0
  %442 = vmatpush2.msra.mxu0 0.0
  %443 = vmatprep.subr.mxu0 0.0
  %444 = vmatpush2.msra.mxu0 0.0
  %445 = vmatprep.subr.mxu0 0.0
  %446 = vmatpush2.msra.mxu0 0.0
  %447 = vmatprep.subr.mxu0 0.0
  %448 = vmatpush2.msra.mxu0 0.0
  %449 = vmatprep.subr.mxu0 0.0
  %450 = vmatpush2.msra.mxu0 0.0
  %451 = vmatprep.subr.mxu0 0.0
  %452 = vmatpush2.msra.mxu0 0.0
  %453 = vmatprep.subr.mxu0 0.0
  %454 = vmatpush2.msra.mxu0 0.0
  %455 = vmatprep.subr.mxu0 0.0
  %456 = vmatpush2.msra.mxu0 0.0
  %457 = vmatprep.subr.mxu0 0.0
  %458 = vmatpush2.msra.mxu0 0.0
  %459 = vmatprep.subr.mxu0 0.0
  %460 = vmatpush2.msra.mxu0 0.0
  %461 = vmatprep.mubr.f32.mxu0 0.0
  %462 = vmatmul.mubr.f32.gmra.mxu0 %v386
  %v463 = vpop.f32.mrf.mxu0
  %v464 = vadd.f32 0.0, %v463
  %v465 = vpop.f32.mrf.mxu0
  %466 = vmatprep.mubr.f32.mxu0 0.0
  %467 = vmatmul.mubr.f32.gmra.mxu0 %v389
  %v468 = vpop.f32.mrf.mxu0
  %v469 = vadd.f32 0.0, %v468
  %v470 = vpop.f32.mrf.mxu0
  %471 = vmatprep.mubr.f32.mxu0 0.0
  %472 = vmatmul.mubr.f32.gmra.mxu0 %v392
  %v473 = vpop.f32.mrf.mxu0
  %v474 = vadd.f32 0.0, %v473
  %v475 = vpop.f32.mrf.mxu0
  %476 = vmatprep.mubr.f32.mxu0 0.0
  %477 = vmatmul.mubr.f32.gmra.mxu0 %v395
  %v478 = vpop.f32.mrf.mxu0
  %v479 = vadd.f32 0.0, %v478
  %v480 = vpop.f32.mrf.mxu0
  %481 = vdwg.mxu0
  %v482 = vrcp.pop %v375
  %v483 = vrcp.pop %v378
  %v484 = vrcp.pop %v381
  %v485 = vrcp.pop %v384
  %v486 = vmul.f32 %v464, %v482
  %v487 = vmul.f32 %v469, %v483
  %v488 = vmul.f32 %v474, %v484
  %v489 = vmul.f32 %v479, %v485
  %490 = vset.pattern.permute.xlu0 1
  %491 = vperm.xlu0 %490, %v286
  %v492 = vpop.permute.xlu0 %491
  %494 = vset.pattern.permute.xlu0 1
  %495 = vperm.xlu0 %494, %v291
  %v496 = vpop.permute.xlu0 %495
  %498 = vset.pattern.permute.xlu0 1
  %499 = vperm.xlu0 %498, %v296
  %v500 = vpop.permute.xlu0 %499
  %502 = vset.pattern.permute.xlu0 1
  %503 = vperm.xlu0 %502, %v301
  %v504 = vpop.permute.xlu0 %503
  %v506 = vlaneseq
  %v507 = vshrl.u32 %v506, 7
  %v508 = vsub.s32 1, %v507
  %v509 = vrot.slane %v214, %v508
  %v510 = vadd.f32 %v492, %v509
  %v511 = vadd.f32 %v496, %v509
  %v512 = vadd.f32 %v500, %v509
  %v513 = vadd.f32 %v504, %v509
  %vm514 = vcmp.gt.f32.partialorder %v510, 0.0
  %vm515 = vcmp.gt.f32.partialorder %v511, 0.0
  %vm516 = vcmp.gt.f32.partialorder %v512, 0.0
  %vm517 = vcmp.gt.f32.partialorder %v513, 0.0
  %v518 = vmul.f32 %v510, 0.2
  %v519 = vmul.f32 %v511, 0.2
  %v520 = vmul.f32 %v512, 0.2
  %v521 = vmul.f32 %v513, 0.2
  %v522 = vsel %vm514, %v510, %v518
  %v523 = vsel %vm515, %v511, %v519
  %v524 = vsel %vm516, %v512, %v520
  %v525 = vsel %vm517, %v513, %v521
  %v526 = vadd.f32 %v522, %v39
  %v527 = vadd.f32 %v523, %v40
  %v528 = vadd.f32 %v524, %v41
  %v529 = vadd.f32 %v525, %v42
  %v530 = vsel %vm348, %v526, -inf
  %531 = vmax.xlane.f32.xlu0 %v530
  %v532 = vpop.xlane.xlu0 %531
  %v533 = vsel %vm348, %v527, -inf
  %534 = vmax.xlane.f32.xlu0 %v533
  %v535 = vpop.xlane.xlu0 %534
  %v536 = vsel %vm348, %v528, -inf
  %537 = vmax.xlane.f32.xlu0 %v536
  %v538 = vpop.xlane.xlu0 %537
  %v539 = vsel %vm348, %v529, -inf
  %540 = vmax.xlane.f32.xlu0 %v539
  %v541 = vpop.xlane.xlu0 %540
  %v542 = vsub.f32 %v526, %v532
  %v543 = vsub.f32 %v527, %v535
  %v544 = vsub.f32 %v528, %v538
  %v545 = vsub.f32 %v529, %v541
  %v546 = vmul.f32 %v542, 1.442695
  %v547 = vpow.pop %v546
  %v548 = vmul.f32 %v543, 1.442695
  %v549 = vpow.pop %v548
  %v550 = vmul.f32 %v544, 1.442695
  %v551 = vpow.pop %v550
  %v552 = vmul.f32 %v545, 1.442695
  %v553 = vpow.pop %v552
  %v554 = vsel %vm348, %v547, 0.0
  %555 = vadd.xlane.f32.xlu0 %v554
  %v556 = vpop.xlane.xlu0 %555
  %v557 = vsel %vm348, %v549, 0.0
  %558 = vadd.xlane.f32.xlu0 %v557
  %v559 = vpop.xlane.xlu0 %558
  %v560 = vsel %vm348, %v551, 0.0
  %561 = vadd.xlane.f32.xlu0 %v560
  %v562 = vpop.xlane.xlu0 %561
  %v563 = vsel %vm348, %v553, 0.0
  %564 = vadd.xlane.f32.xlu0 %v563
  %v565 = vpop.xlane.xlu0 %564
  %570 = vrot.lane.b32.xlu0 %v125, 120
  %v571 = vpop.permute.xlu0 %570
  %572 = vrot.lane.b32.xlu0 %v130, 120
  %v573 = vpop.permute.xlu0 %572
  %574 = vrot.lane.b32.xlu0 %v135, 120
  %v575 = vpop.permute.xlu0 %574
  %576 = vrot.lane.b32.xlu0 %v140, 120
  %v577 = vpop.permute.xlu0 %576
  %v583 = vsel %vm348, %v547, 0
  %v586 = vsel %vm348, %v549, 0
  %v589 = vsel %vm348, %v551, 0
  %v592 = vsel %vm348, %v553, 0
  %594 = vmatprep.subr.mxu0 0.0
  %595 = vmatpush1.msra.mxu0 0.0
  %596 = vmatprep.subr.mxu0 0.0
  %597 = vmatpush1.msra.mxu0 0.0
  %598 = vmatprep.subr.mxu0 0.0
  %599 = vmatpush1.msra.mxu0 0.0
  %600 = vmatprep.subr.mxu0 0.0
  %601 = vmatpush1.msra.mxu0 0.0
  %602 = vmatprep.subr.mxu0 0.0
  %603 = vmatpush1.msra.mxu0 0.0
  %604 = vmatprep.subr.mxu0 0.0
  %605 = vmatpush1.msra.mxu0 0.0
  %606 = vmatprep.subr.mxu0 0.0
  %607 = vmatpush1.msra.mxu0 0.0
  %608 = vmatprep.subr.mxu0 0.0
  %609 = vmatpush1.msra.mxu0 0.0
  %610 = vmatprep.subr.mxu0 0.0
  %611 = vmatpush1.msra.mxu0 0.0
  %612 = vmatprep.subr.mxu0 0.0
  %613 = vmatpush1.msra.mxu0 0.0
  %614 = vmatprep.subr.mxu0 0.0
  %615 = vmatpush1.msra.mxu0 0.0
  %616 = vmatprep.subr.mxu0 0.0
  %617 = vmatpush1.msra.mxu0 0.0
  %618 = vmatprep.subr.mxu0 0.0
  %619 = vmatpush1.msra.mxu0 %v577
  %620 = vmatprep.subr.mxu0 0.0
  %621 = vmatpush1.msra.mxu0 %v575
  %622 = vmatprep.subr.mxu0 0.0
  %623 = vmatpush1.msra.mxu0 %v573
  %624 = vmatprep.subr.mxu0 0.0
  %625 = vmatpush1.msra.mxu0 %v571
  %626 = vmatprep.subr.mxu0 0.0
  %627 = vmatpush2.msra.mxu0 0.0
  %628 = vmatprep.subr.mxu0 0.0
  %629 = vmatpush2.msra.mxu0 0.0
  %630 = vmatprep.subr.mxu0 0.0
  %631 = vmatpush2.msra.mxu0 0.0
  %632 = vmatprep.subr.mxu0 0.0
  %633 = vmatpush2.msra.mxu0 0.0
  %634 = vmatprep.subr.mxu0 0.0
  %635 = vmatpush2.msra.mxu0 0.0
  %636 = vmatprep.subr.mxu0 0.0
  %637 = vmatpush2.msra.mxu0 0.0
  %638 = vmatprep.subr.mxu0 0.0
  %639 = vmatpush2.msra.mxu0 0.0
  %640 = vmatprep.subr.mxu0 0.0
  %641 = vmatpush2.msra.mxu0 0.0
  %642 = vmatprep.subr.mxu0 0.0
  %643 = vmatpush2.msra.mxu0 0.0
  %644 = vmatprep.subr.mxu0 0.0
  %645 = vmatpush2.msra.mxu0 0.0
  %646 = vmatprep.subr.mxu0 0.0
  %647 = vmatpush2.msra.mxu0 0.0
  %648 = vmatprep.subr.mxu0 0.0
  %649 = vmatpush2.msra.mxu0 0.0
  %650 = vmatprep.subr.mxu0 0.0
  %651 = vmatpush2.msra.mxu0 0.0
  %652 = vmatprep.subr.mxu0 0.0
  %653 = vmatpush2.msra.mxu0 0.0
  %654 = vmatprep.subr.mxu0 0.0
  %655 = vmatpush2.msra.mxu0 0.0
  %656 = vmatprep.subr.mxu0 0.0
  %657 = vmatpush2.msra.mxu0 0.0
  %658 = vmatprep.mubr.f32.mxu0 0.0
  %659 = vmatmul.mubr.f32.gmra.mxu0 %v583
  %v660 = vpop.f32.mrf.mxu0
  %v661 = vadd.f32 0.0, %v660
  %v662 = vpop.f32.mrf.mxu0
  %663 = vmatprep.mubr.f32.mxu0 0.0
  %664 = vmatmul.mubr.f32.gmra.mxu0 %v586
  %v665 = vpop.f32.mrf.mxu0
  %v666 = vadd.f32 0.0, %v665
  %v667 = vpop.f32.mrf.mxu0
  %668 = vmatprep.mubr.f32.mxu0 0.0
  %669 = vmatmul.mubr.f32.gmra.mxu0 %v589
  %v670 = vpop.f32.mrf.mxu0
  %v671 = vadd.f32 0.0, %v670
  %v672 = vpop.f32.mrf.mxu0
  %673 = vmatprep.mubr.f32.mxu0 0.0
  %674 = vmatmul.mubr.f32.gmra.mxu0 %v592
  %v675 = vpop.f32.mrf.mxu0
  %v676 = vadd.f32 0.0, %v675
  %v677 = vpop.f32.mrf.mxu0
  %678 = vdwg.mxu0
  %v679 = vrcp.pop %v556
  %v680 = vrcp.pop %v559
  %v681 = vrcp.pop %v562
  %v682 = vrcp.pop %v565
  %v683 = vmul.f32 %v661, %v679
  %v684 = vmul.f32 %v666, %v680
  %v685 = vmul.f32 %v671, %v681
  %v686 = vmul.f32 %v676, %v682
  %687 = vset.pattern.permute.xlu0 2
  %688 = vperm.xlu0 %687, %v286
  %v689 = vpop.permute.xlu0 %688
  %691 = vset.pattern.permute.xlu0 2
  %692 = vperm.xlu0 %691, %v291
  %v693 = vpop.permute.xlu0 %692
  %695 = vset.pattern.permute.xlu0 2
  %696 = vperm.xlu0 %695, %v296
  %v697 = vpop.permute.xlu0 %696
  %699 = vset.pattern.permute.xlu0 2
  %700 = vperm.xlu0 %699, %v301
  %v701 = vpop.permute.xlu0 %700
  %v703 = vlaneseq
  %v704 = vshrl.u32 %v703, 7
  %v705 = vsub.s32 2, %v704
  %v706 = vrot.slane %v214, %v705
  %v707 = vadd.f32 %v689, %v706
  %v708 = vadd.f32 %v693, %v706
  %v709 = vadd.f32 %v697, %v706
  %v710 = vadd.f32 %v701, %v706
  %vm711 = vcmp.gt.f32.partialorder %v707, 0.0
  %vm712 = vcmp.gt.f32.partialorder %v708, 0.0
  %vm713 = vcmp.gt.f32.partialorder %v709, 0.0
  %vm714 = vcmp.gt.f32.partialorder %v710, 0.0
  %v715 = vmul.f32 %v707, 0.2
  %v716 = vmul.f32 %v708, 0.2
  %v717 = vmul.f32 %v709, 0.2
  %v718 = vmul.f32 %v710, 0.2
  %v719 = vsel %vm711, %v707, %v715
  %v720 = vsel %vm712, %v708, %v716
  %v721 = vsel %vm713, %v709, %v717
  %v722 = vsel %vm714, %v710, %v718
  %v723 = vadd.f32 %v719, %v39
  %v724 = vadd.f32 %v720, %v40
  %v725 = vadd.f32 %v721, %v41
  %v726 = vadd.f32 %v722, %v42
  %v727 = vsel %vm348, %v723, -inf
  %728 = vmax.xlane.f32.xlu0 %v727
  %v729 = vpop.xlane.xlu0 %728
  %v730 = vsel %vm348, %v724, -inf
  %731 = vmax.xlane.f32.xlu0 %v730
  %v732 = vpop.xlane.xlu0 %731
  %v733 = vsel %vm348, %v725, -inf
  %734 = vmax.xlane.f32.xlu0 %v733
  %v735 = vpop.xlane.xlu0 %734
  %v736 = vsel %vm348, %v726, -inf
  %737 = vmax.xlane.f32.xlu0 %v736
  %v738 = vpop.xlane.xlu0 %737
  %v739 = vsub.f32 %v723, %v729
  %v740 = vsub.f32 %v724, %v732
  %v741 = vsub.f32 %v725, %v735
  %v742 = vsub.f32 %v726, %v738
  %v743 = vmul.f32 %v739, 1.442695
  %v744 = vpow.pop %v743
  %v745 = vmul.f32 %v740, 1.442695
  %v746 = vpow.pop %v745
  %v747 = vmul.f32 %v741, 1.442695
  %v748 = vpow.pop %v747
  %v749 = vmul.f32 %v742, 1.442695
  %v750 = vpow.pop %v749
  %v751 = vsel %vm348, %v744, 0.0
  %752 = vadd.xlane.f32.xlu0 %v751
  %v753 = vpop.xlane.xlu0 %752
  %v754 = vsel %vm348, %v746, 0.0
  %755 = vadd.xlane.f32.xlu0 %v754
  %v756 = vpop.xlane.xlu0 %755
  %v757 = vsel %vm348, %v748, 0.0
  %758 = vadd.xlane.f32.xlu0 %v757
  %v759 = vpop.xlane.xlu0 %758
  %v760 = vsel %vm348, %v750, 0.0
  %761 = vadd.xlane.f32.xlu0 %v760
  %v762 = vpop.xlane.xlu0 %761
  %763 = vrot.lane.b32.xlu0 %v125, 112
  %v764 = vpop.permute.xlu0 %763
  %765 = vrot.lane.b32.xlu0 %v130, 112
  %v766 = vpop.permute.xlu0 %765
  %767 = vrot.lane.b32.xlu0 %v135, 112
  %v768 = vpop.permute.xlu0 %767
  %769 = vrot.lane.b32.xlu0 %v140, 112
  %v770 = vpop.permute.xlu0 %769
  %v776 = vsel %vm348, %v744, 0
  %v779 = vsel %vm348, %v746, 0
  %v782 = vsel %vm348, %v748, 0
  %v785 = vsel %vm348, %v750, 0
  %787 = vmatprep.subr.mxu0 0.0
  %788 = vmatpush1.msra.mxu0 0.0
  %789 = vmatprep.subr.mxu0 0.0
  %790 = vmatpush1.msra.mxu0 0.0
  %791 = vmatprep.subr.mxu0 0.0
  %792 = vmatpush1.msra.mxu0 0.0
  %793 = vmatprep.subr.mxu0 0.0
  %794 = vmatpush1.msra.mxu0 0.0
  %795 = vmatprep.subr.mxu0 0.0
  %796 = vmatpush1.msra.mxu0 0.0
  %797 = vmatprep.subr.mxu0 0.0
  %798 = vmatpush1.msra.mxu0 0.0
  %799 = vmatprep.subr.mxu0 0.0
  %800 = vmatpush1.msra.mxu0 0.0
  %801 = vmatprep.subr.mxu0 0.0
  %802 = vmatpush1.msra.mxu0 0.0
  %803 = vmatprep.subr.mxu0 0.0
  %804 = vmatpush1.msra.mxu0 0.0
  %805 = vmatprep.subr.mxu0 0.0
  %806 = vmatpush1.msra.mxu0 0.0
  %807 = vmatprep.subr.mxu0 0.0
  %808 = vmatpush1.msra.mxu0 0.0
  %809 = vmatprep.subr.mxu0 0.0
  %810 = vmatpush1.msra.mxu0 0.0
  %811 = vmatprep.subr.mxu0 0.0
  %812 = vmatpush1.msra.mxu0 %v770
  %813 = vmatprep.subr.mxu0 0.0
  %814 = vmatpush1.msra.mxu0 %v768
  %815 = vmatprep.subr.mxu0 0.0
  %816 = vmatpush1.msra.mxu0 %v766
  %817 = vmatprep.subr.mxu0 0.0
  %818 = vmatpush1.msra.mxu0 %v764
  %819 = vmatprep.subr.mxu0 0.0
  %820 = vmatpush2.msra.mxu0 0.0
  %821 = vmatprep.subr.mxu0 0.0
  %822 = vmatpush2.msra.mxu0 0.0
  %823 = vmatprep.subr.mxu0 0.0
  %824 = vmatpush2.msra.mxu0 0.0
  %825 = vmatprep.subr.mxu0 0.0
  %826 = vmatpush2.msra.mxu0 0.0
  %827 = vmatprep.subr.mxu0 0.0
  %828 = vmatpush2.msra.mxu0 0.0
  %829 = vmatprep.subr.mxu0 0.0
  %830 = vmatpush2.msra.mxu0 0.0
  %831 = vmatprep.subr.mxu0 0.0
  %832 = vmatpush2.msra.mxu0 0.0
  %833 = vmatprep.subr.mxu0 0.0
  %834 = vmatpush2.msra.mxu0 0.0
  %835 = vmatprep.subr.mxu0 0.0
  %836 = vmatpush2.msra.mxu0 0.0
  %837 = vmatprep.subr.mxu0 0.0
  %838 = vmatpush2.msra.mxu0 0.0
  %839 = vmatprep.subr.mxu0 0.0
  %840 = vmatpush2.msra.mxu0 0.0
  %841 = vmatprep.subr.mxu0 0.0
  %842 = vmatpush2.msra.mxu0 0.0
  %843 = vmatprep.subr.mxu0 0.0
  %844 = vmatpush2.msra.mxu0 0.0
  %845 = vmatprep.subr.mxu0 0.0
  %846 = vmatpush2.msra.mxu0 0.0
  %847 = vmatprep.subr.mxu0 0.0
  %848 = vmatpush2.msra.mxu0 0.0
  %849 = vmatprep.subr.mxu0 0.0
  %850 = vmatpush2.msra.mxu0 0.0
  %851 = vmatprep.mubr.f32.mxu0 0.0
  %852 = vmatmul.mubr.f32.gmra.mxu0 %v776
  %v853 = vpop.f32.mrf.mxu0
  %v854 = vadd.f32 0.0, %v853
  %v855 = vpop.f32.mrf.mxu0
  %856 = vmatprep.mubr.f32.mxu0 0.0
  %857 = vmatmul.mubr.f32.gmra.mxu0 %v779
  %v858 = vpop.f32.mrf.mxu0
  %v859 = vadd.f32 0.0, %v858
  %v860 = vpop.f32.mrf.mxu0
  %861 = vmatprep.mubr.f32.mxu0 0.0
  %862 = vmatmul.mubr.f32.gmra.mxu0 %v782
  %v863 = vpop.f32.mrf.mxu0
  %v864 = vadd.f32 0.0, %v863
  %v865 = vpop.f32.mrf.mxu0
  %866 = vmatprep.mubr.f32.mxu0 0.0
  %867 = vmatmul.mubr.f32.gmra.mxu0 %v785
  %v868 = vpop.f32.mrf.mxu0
  %v869 = vadd.f32 0.0, %v868
  %v870 = vpop.f32.mrf.mxu0
  %871 = vdwg.mxu0
  %v872 = vrcp.pop %v753
  %v873 = vrcp.pop %v756
  %v874 = vrcp.pop %v759
  %v875 = vrcp.pop %v762
  %v876 = vmul.f32 %v854, %v872
  %v877 = vmul.f32 %v859, %v873
  %v878 = vmul.f32 %v864, %v874
  %v879 = vmul.f32 %v869, %v875
  %880 = vset.pattern.permute.xlu0 3
  %881 = vperm.xlu0 %880, %v286
  %v882 = vpop.permute.xlu0 %881
  %884 = vset.pattern.permute.xlu0 3
  %885 = vperm.xlu0 %884, %v291
  %v886 = vpop.permute.xlu0 %885
  %888 = vset.pattern.permute.xlu0 3
  %889 = vperm.xlu0 %888, %v296
  %v890 = vpop.permute.xlu0 %889
  %892 = vset.pattern.permute.xlu0 3
  %893 = vperm.xlu0 %892, %v301
  %v894 = vpop.permute.xlu0 %893
  %v896 = vlaneseq
  %v897 = vshrl.u32 %v896, 7
  %v898 = vsub.s32 3, %v897
  %v899 = vrot.slane %v214, %v898
  %v900 = vadd.f32 %v882, %v899
  %v901 = vadd.f32 %v886, %v899
  %v902 = vadd.f32 %v890, %v899
  %v903 = vadd.f32 %v894, %v899
  %vm904 = vcmp.gt.f32.partialorder %v900, 0.0
  %vm905 = vcmp.gt.f32.partialorder %v901, 0.0
  %vm906 = vcmp.gt.f32.partialorder %v902, 0.0
  %vm907 = vcmp.gt.f32.partialorder %v903, 0.0
  %v908 = vmul.f32 %v900, 0.2
  %v909 = vmul.f32 %v901, 0.2
  %v910 = vmul.f32 %v902, 0.2
  %v911 = vmul.f32 %v903, 0.2
  %v912 = vsel %vm904, %v900, %v908
  %v913 = vsel %vm905, %v901, %v909
  %v914 = vsel %vm906, %v902, %v910
  %v915 = vsel %vm907, %v903, %v911
  %v916 = vadd.f32 %v912, %v39
  %v917 = vadd.f32 %v913, %v40
  %v918 = vadd.f32 %v914, %v41
  %v919 = vadd.f32 %v915, %v42
  %v920 = vsel %vm348, %v916, -inf
  %921 = vmax.xlane.f32.xlu0 %v920
  %v922 = vpop.xlane.xlu0 %921
  %v923 = vsel %vm348, %v917, -inf
  %924 = vmax.xlane.f32.xlu0 %v923
  %v925 = vpop.xlane.xlu0 %924
  %v926 = vsel %vm348, %v918, -inf
  %927 = vmax.xlane.f32.xlu0 %v926
  %v928 = vpop.xlane.xlu0 %927
  %v929 = vsel %vm348, %v919, -inf
  %930 = vmax.xlane.f32.xlu0 %v929
  %v931 = vpop.xlane.xlu0 %930
  %v932 = vsub.f32 %v916, %v922
  %v933 = vsub.f32 %v917, %v925
  %v934 = vsub.f32 %v918, %v928
  %v935 = vsub.f32 %v919, %v931
  %v936 = vmul.f32 %v932, 1.442695
  %v937 = vpow.pop %v936
  %v938 = vmul.f32 %v933, 1.442695
  %v939 = vpow.pop %v938
  %v940 = vmul.f32 %v934, 1.442695
  %v941 = vpow.pop %v940
  %v942 = vmul.f32 %v935, 1.442695
  %v943 = vpow.pop %v942
  %v944 = vsel %vm348, %v937, 0.0
  %945 = vadd.xlane.f32.xlu0 %v944
  %v946 = vpop.xlane.xlu0 %945
  %v947 = vsel %vm348, %v939, 0.0
  %948 = vadd.xlane.f32.xlu0 %v947
  %v949 = vpop.xlane.xlu0 %948
  %v950 = vsel %vm348, %v941, 0.0
  %951 = vadd.xlane.f32.xlu0 %v950
  %v952 = vpop.xlane.xlu0 %951
  %v953 = vsel %vm348, %v943, 0.0
  %954 = vadd.xlane.f32.xlu0 %v953
  %v955 = vpop.xlane.xlu0 %954
  %956 = vrot.lane.b32.xlu0 %v125, 104
  %v957 = vpop.permute.xlu0 %956
  %958 = vrot.lane.b32.xlu0 %v130, 104
  %v959 = vpop.permute.xlu0 %958
  %960 = vrot.lane.b32.xlu0 %v135, 104
  %v961 = vpop.permute.xlu0 %960
  %962 = vrot.lane.b32.xlu0 %v140, 104
  %v963 = vpop.permute.xlu0 %962
  %v969 = vsel %vm348, %v937, 0
  %v972 = vsel %vm348, %v939, 0
  %v975 = vsel %vm348, %v941, 0
  %v978 = vsel %vm348, %v943, 0
  %980 = vmatprep.subr.mxu0 0.0
  %981 = vmatpush1.msra.mxu0 0.0
  %982 = vmatprep.subr.mxu0 0.0
  %983 = vmatpush1.msra.mxu0 0.0
  %984 = vmatprep.subr.mxu0 0.0
  %985 = vmatpush1.msra.mxu0 0.0
  %986 = vmatprep.subr.mxu0 0.0
  %987 = vmatpush1.msra.mxu0 0.0
  %988 = vmatprep.subr.mxu0 0.0
  %989 = vmatpush1.msra.mxu0 0.0
  %990 = vmatprep.subr.mxu0 0.0
  %991 = vmatpush1.msra.mxu0 0.0
  %992 = vmatprep.subr.mxu0 0.0
  %993 = vmatpush1.msra.mxu0 0.0
  %994 = vmatprep.subr.mxu0 0.0
  %995 = vmatpush1.msra.mxu0 0.0
  %996 = vmatprep.subr.mxu0 0.0
  %997 = vmatpush1.msra.mxu0 0.0
  %998 = vmatprep.subr.mxu0 0.0
  %999 = vmatpush1.msra.mxu0 0.0
  %1000 = vmatprep.subr.mxu0 0.0
  %1001 = vmatpush1.msra.mxu0 0.0
  %1002 = vmatprep.subr.mxu0 0.0
  %1003 = vmatpush1.msra.mxu0 0.0
  %1004 = vmatprep.subr.mxu0 0.0
  %1005 = vmatpush1.msra.mxu0 %v963
  %1006 = vmatprep.subr.mxu0 0.0
  %1007 = vmatpush1.msra.mxu0 %v961
  %1008 = vmatprep.subr.mxu0 0.0
  %1009 = vmatpush1.msra.mxu0 %v959
  %1010 = vmatprep.subr.mxu0 0.0
  %1011 = vmatpush1.msra.mxu0 %v957
  %1012 = vmatprep.subr.mxu0 0.0
  %1013 = vmatpush2.msra.mxu0 0.0
  %1014 = vmatprep.subr.mxu0 0.0
  %1015 = vmatpush2.msra.mxu0 0.0
  %1016 = vmatprep.subr.mxu0 0.0
  %1017 = vmatpush2.msra.mxu0 0.0
  %1018 = vmatprep.subr.mxu0 0.0
  %1019 = vmatpush2.msra.mxu0 0.0
  %1020 = vmatprep.subr.mxu0 0.0
  %1021 = vmatpush2.msra.mxu0 0.0
  %1022 = vmatprep.subr.mxu0 0.0
  %1023 = vmatpush2.msra.mxu0 0.0
  %1024 = vmatprep.subr.mxu0 0.0
  %1025 = vmatpush2.msra.mxu0 0.0
  %1026 = vmatprep.subr.mxu0 0.0
  %1027 = vmatpush2.msra.mxu0 0.0
  %1028 = vmatprep.subr.mxu0 0.0
  %1029 = vmatpush2.msra.mxu0 0.0
  %1030 = vmatprep.subr.mxu0 0.0
  %1031 = vmatpush2.msra.mxu0 0.0
  %1032 = vmatprep.subr.mxu0 0.0
  %1033 = vmatpush2.msra.mxu0 0.0
  %1034 = vmatprep.subr.mxu0 0.0
  %1035 = vmatpush2.msra.mxu0 0.0
  %1036 = vmatprep.subr.mxu0 0.0
  %1037 = vmatpush2.msra.mxu0 0.0
  %1038 = vmatprep.subr.mxu0 0.0
  %1039 = vmatpush2.msra.mxu0 0.0
  %1040 = vmatprep.subr.mxu0 0.0
  %1041 = vmatpush2.msra.mxu0 0.0
  %1042 = vmatprep.subr.mxu0 0.0
  %1043 = vmatpush2.msra.mxu0 0.0
  %1044 = vmatprep.mubr.f32.mxu0 0.0
  %1045 = vmatmul.mubr.f32.gmra.mxu0 %v969
  %v1046 = vpop.f32.mrf.mxu0
  %v1047 = vadd.f32 0.0, %v1046
  %v1048 = vpop.f32.mrf.mxu0
  %1049 = vmatprep.mubr.f32.mxu0 0.0
  %1050 = vmatmul.mubr.f32.gmra.mxu0 %v972
  %v1051 = vpop.f32.mrf.mxu0
  %v1052 = vadd.f32 0.0, %v1051
  %v1053 = vpop.f32.mrf.mxu0
  %1054 = vmatprep.mubr.f32.mxu0 0.0
  %1055 = vmatmul.mubr.f32.gmra.mxu0 %v975
  %v1056 = vpop.f32.mrf.mxu0
  %v1057 = vadd.f32 0.0, %v1056
  %v1058 = vpop.f32.mrf.mxu0
  %1059 = vmatprep.mubr.f32.mxu0 0.0
  %1060 = vmatmul.mubr.f32.gmra.mxu0 %v978
  %v1061 = vpop.f32.mrf.mxu0
  %v1062 = vadd.f32 0.0, %v1061
  %v1063 = vpop.f32.mrf.mxu0
  %1064 = vdwg.mxu0
  %v1065 = vrcp.pop %v946
  %v1066 = vrcp.pop %v949
  %v1067 = vrcp.pop %v952
  %v1068 = vrcp.pop %v955
  %v1069 = vmul.f32 %v1047, %v1065
  %v1070 = vmul.f32 %v1052, %v1066
  %v1071 = vmul.f32 %v1057, %v1067
  %v1072 = vmul.f32 %v1062, %v1068
  %1073 = vset.pattern.permute.xlu0 4
  %1074 = vperm.xlu0 %1073, %v286
  %v1075 = vpop.permute.xlu0 %1074
  %1077 = vset.pattern.permute.xlu0 4
  %1078 = vperm.xlu0 %1077, %v291
  %v1079 = vpop.permute.xlu0 %1078
  %1081 = vset.pattern.permute.xlu0 4
  %1082 = vperm.xlu0 %1081, %v296
  %v1083 = vpop.permute.xlu0 %1082
  %1085 = vset.pattern.permute.xlu0 4
  %1086 = vperm.xlu0 %1085, %v301
  %v1087 = vpop.permute.xlu0 %1086
  %v1089 = vlaneseq
  %v1090 = vshrl.u32 %v1089, 7
  %v1091 = vsub.s32 4, %v1090
  %v1092 = vrot.slane %v214, %v1091
  %v1093 = vadd.f32 %v1075, %v1092
  %v1094 = vadd.f32 %v1079, %v1092
  %v1095 = vadd.f32 %v1083, %v1092
  %v1096 = vadd.f32 %v1087, %v1092
  %vm1097 = vcmp.gt.f32.partialorder %v1093, 0.0
  %vm1098 = vcmp.gt.f32.partialorder %v1094, 0.0
  %vm1099 = vcmp.gt.f32.partialorder %v1095, 0.0
  %vm1100 = vcmp.gt.f32.partialorder %v1096, 0.0
  %v1101 = vmul.f32 %v1093, 0.2
  %v1102 = vmul.f32 %v1094, 0.2
  %v1103 = vmul.f32 %v1095, 0.2
  %v1104 = vmul.f32 %v1096, 0.2
  %v1105 = vsel %vm1097, %v1093, %v1101
  %v1106 = vsel %vm1098, %v1094, %v1102
  %v1107 = vsel %vm1099, %v1095, %v1103
  %v1108 = vsel %vm1100, %v1096, %v1104
  %v1109 = vadd.f32 %v1105, %v39
  %v1110 = vadd.f32 %v1106, %v40
  %v1111 = vadd.f32 %v1107, %v41
  %v1112 = vadd.f32 %v1108, %v42
  %v1113 = vsel %vm348, %v1109, -inf
  %1114 = vmax.xlane.f32.xlu0 %v1113
  %v1115 = vpop.xlane.xlu0 %1114
  %v1116 = vsel %vm348, %v1110, -inf
  %1117 = vmax.xlane.f32.xlu0 %v1116
  %v1118 = vpop.xlane.xlu0 %1117
  %v1119 = vsel %vm348, %v1111, -inf
  %1120 = vmax.xlane.f32.xlu0 %v1119
  %v1121 = vpop.xlane.xlu0 %1120
  %v1122 = vsel %vm348, %v1112, -inf
  %1123 = vmax.xlane.f32.xlu0 %v1122
  %v1124 = vpop.xlane.xlu0 %1123
  %v1125 = vsub.f32 %v1109, %v1115
  %v1126 = vsub.f32 %v1110, %v1118
  %v1127 = vsub.f32 %v1111, %v1121
  %v1128 = vsub.f32 %v1112, %v1124
  %v1129 = vmul.f32 %v1125, 1.442695
  %v1130 = vpow.pop %v1129
  %v1131 = vmul.f32 %v1126, 1.442695
  %v1132 = vpow.pop %v1131
  %v1133 = vmul.f32 %v1127, 1.442695
  %v1134 = vpow.pop %v1133
  %v1135 = vmul.f32 %v1128, 1.442695
  %v1136 = vpow.pop %v1135
  %v1137 = vsel %vm348, %v1130, 0.0
  %1138 = vadd.xlane.f32.xlu0 %v1137
  %v1139 = vpop.xlane.xlu0 %1138
  %v1140 = vsel %vm348, %v1132, 0.0
  %1141 = vadd.xlane.f32.xlu0 %v1140
  %v1142 = vpop.xlane.xlu0 %1141
  %v1143 = vsel %vm348, %v1134, 0.0
  %1144 = vadd.xlane.f32.xlu0 %v1143
  %v1145 = vpop.xlane.xlu0 %1144
  %v1146 = vsel %vm348, %v1136, 0.0
  %1147 = vadd.xlane.f32.xlu0 %v1146
  %v1148 = vpop.xlane.xlu0 %1147
  %1149 = vrot.lane.b32.xlu0 %v125, 96
  %v1150 = vpop.permute.xlu0 %1149
  %1151 = vrot.lane.b32.xlu0 %v130, 96
  %v1152 = vpop.permute.xlu0 %1151
  %1153 = vrot.lane.b32.xlu0 %v135, 96
  %v1154 = vpop.permute.xlu0 %1153
  %1155 = vrot.lane.b32.xlu0 %v140, 96
  %v1156 = vpop.permute.xlu0 %1155
  %v1162 = vsel %vm348, %v1130, 0
  %v1165 = vsel %vm348, %v1132, 0
  %v1168 = vsel %vm348, %v1134, 0
  %v1171 = vsel %vm348, %v1136, 0
  %1173 = vmatprep.subr.mxu0 0.0
  %1174 = vmatpush1.msra.mxu0 0.0
  %1175 = vmatprep.subr.mxu0 0.0
  %1176 = vmatpush1.msra.mxu0 0.0
  %1177 = vmatprep.subr.mxu0 0.0
  %1178 = vmatpush1.msra.mxu0 0.0
  %1179 = vmatprep.subr.mxu0 0.0
  %1180 = vmatpush1.msra.mxu0 0.0
  %1181 = vmatprep.subr.mxu0 0.0
  %1182 = vmatpush1.msra.mxu0 0.0
  %1183 = vmatprep.subr.mxu0 0.0
  %1184 = vmatpush1.msra.mxu0 0.0
  %1185 = vmatprep.subr.mxu0 0.0
  %1186 = vmatpush1.msra.mxu0 0.0
  %1187 = vmatprep.subr.mxu0 0.0
  %1188 = vmatpush1.msra.mxu0 0.0
  %1189 = vmatprep.subr.mxu0 0.0
  %1190 = vmatpush1.msra.mxu0 0.0
  %1191 = vmatprep.subr.mxu0 0.0
  %1192 = vmatpush1.msra.mxu0 0.0
  %1193 = vmatprep.subr.mxu0 0.0
  %1194 = vmatpush1.msra.mxu0 0.0
  %1195 = vmatprep.subr.mxu0 0.0
  %1196 = vmatpush1.msra.mxu0 0.0
  %1197 = vmatprep.subr.mxu0 0.0
  %1198 = vmatpush1.msra.mxu0 %v1156
  %1199 = vmatprep.subr.mxu0 0.0
  %1200 = vmatpush1.msra.mxu0 %v1154
  %1201 = vmatprep.subr.mxu0 0.0
  %1202 = vmatpush1.msra.mxu0 %v1152
  %1203 = vmatprep.subr.mxu0 0.0
  %1204 = vmatpush1.msra.mxu0 %v1150
  %1205 = vmatprep.subr.mxu0 0.0
  %1206 = vmatpush2.msra.mxu0 0.0
  %1207 = vmatprep.subr.mxu0 0.0
  %1208 = vmatpush2.msra.mxu0 0.0
  %1209 = vmatprep.subr.mxu0 0.0
  %1210 = vmatpush2.msra.mxu0 0.0
  %1211 = vmatprep.subr.mxu0 0.0
  %1212 = vmatpush2.msra.mxu0 0.0
  %1213 = vmatprep.subr.mxu0 0.0
  %1214 = vmatpush2.msra.mxu0 0.0
  %1215 = vmatprep.subr.mxu0 0.0
  %1216 = vmatpush2.msra.mxu0 0.0
  %1217 = vmatprep.subr.mxu0 0.0
  %1218 = vmatpush2.msra.mxu0 0.0
  %1219 = vmatprep.subr.mxu0 0.0
  %1220 = vmatpush2.msra.mxu0 0.0
  %1221 = vmatprep.subr.mxu0 0.0
  %1222 = vmatpush2.msra.mxu0 0.0
  %1223 = vmatprep.subr.mxu0 0.0
  %1224 = vmatpush2.msra.mxu0 0.0
  %1225 = vmatprep.subr.mxu0 0.0
  %1226 = vmatpush2.msra.mxu0 0.0
  %1227 = vmatprep.subr.mxu0 0.0
  %1228 = vmatpush2.msra.mxu0 0.0
  %1229 = vmatprep.subr.mxu0 0.0
  %1230 = vmatpush2.msra.mxu0 0.0
  %1231 = vmatprep.subr.mxu0 0.0
  %1232 = vmatpush2.msra.mxu0 0.0
  %1233 = vmatprep.subr.mxu0 0.0
  %1234 = vmatpush2.msra.mxu0 0.0
  %1235 = vmatprep.subr.mxu0 0.0
  %1236 = vmatpush2.msra.mxu0 0.0
  %1237 = vmatprep.mubr.f32.mxu0 0.0
  %1238 = vmatmul.mubr.f32.gmra.mxu0 %v1162
  %v1239 = vpop.f32.mrf.mxu0
  %v1240 = vadd.f32 0.0, %v1239
  %v1241 = vpop.f32.mrf.mxu0
  %1242 = vmatprep.mubr.f32.mxu0 0.0
  %1243 = vmatmul.mubr.f32.gmra.mxu0 %v1165
  %v1244 = vpop.f32.mrf.mxu0
  %v1245 = vadd.f32 0.0, %v1244
  %v1246 = vpop.f32.mrf.mxu0
  %1247 = vmatprep.mubr.f32.mxu0 0.0
  %1248 = vmatmul.mubr.f32.gmra.mxu0 %v1168
  %v1249 = vpop.f32.mrf.mxu0
  %v1250 = vadd.f32 0.0, %v1249
  %v1251 = vpop.f32.mrf.mxu0
  %1252 = vmatprep.mubr.f32.mxu0 0.0
  %1253 = vmatmul.mubr.f32.gmra.mxu0 %v1171
  %v1254 = vpop.f32.mrf.mxu0
  %v1255 = vadd.f32 0.0, %v1254
  %v1256 = vpop.f32.mrf.mxu0
  %1257 = vdwg.mxu0
  %v1258 = vrcp.pop %v1139
  %v1259 = vrcp.pop %v1142
  %v1260 = vrcp.pop %v1145
  %v1261 = vrcp.pop %v1148
  %v1262 = vmul.f32 %v1240, %v1258
  %v1263 = vmul.f32 %v1245, %v1259
  %v1264 = vmul.f32 %v1250, %v1260
  %v1265 = vmul.f32 %v1255, %v1261
  %1266 = vset.pattern.permute.xlu0 5
  %1267 = vperm.xlu0 %1266, %v286
  %v1268 = vpop.permute.xlu0 %1267
  %1270 = vset.pattern.permute.xlu0 5
  %1271 = vperm.xlu0 %1270, %v291
  %v1272 = vpop.permute.xlu0 %1271
  %1274 = vset.pattern.permute.xlu0 5
  %1275 = vperm.xlu0 %1274, %v296
  %v1276 = vpop.permute.xlu0 %1275
  %1278 = vset.pattern.permute.xlu0 5
  %1279 = vperm.xlu0 %1278, %v301
  %v1280 = vpop.permute.xlu0 %1279
  %v1282 = vlaneseq
  %v1283 = vshrl.u32 %v1282, 7
  %v1284 = vsub.s32 5, %v1283
  %v1285 = vrot.slane %v214, %v1284
  %v1286 = vadd.f32 %v1268, %v1285
  %v1287 = vadd.f32 %v1272, %v1285
  %v1288 = vadd.f32 %v1276, %v1285
  %v1289 = vadd.f32 %v1280, %v1285
  %vm1290 = vcmp.gt.f32.partialorder %v1286, 0.0
  %vm1291 = vcmp.gt.f32.partialorder %v1287, 0.0
  %vm1292 = vcmp.gt.f32.partialorder %v1288, 0.0
  %vm1293 = vcmp.gt.f32.partialorder %v1289, 0.0
  %v1294 = vmul.f32 %v1286, 0.2
  %v1295 = vmul.f32 %v1287, 0.2
  %v1296 = vmul.f32 %v1288, 0.2
  %v1297 = vmul.f32 %v1289, 0.2
  %v1298 = vsel %vm1290, %v1286, %v1294
  %v1299 = vsel %vm1291, %v1287, %v1295
  %v1300 = vsel %vm1292, %v1288, %v1296
  %v1301 = vsel %vm1293, %v1289, %v1297
  %v1302 = vadd.f32 %v1298, %v39
  %v1303 = vadd.f32 %v1299, %v40
  %v1304 = vadd.f32 %v1300, %v41
  %v1305 = vadd.f32 %v1301, %v42
  %v1306 = vsel %vm348, %v1302, -inf
  %1307 = vmax.xlane.f32.xlu0 %v1306
  %v1308 = vpop.xlane.xlu0 %1307
  %v1309 = vsel %vm348, %v1303, -inf
  %1310 = vmax.xlane.f32.xlu0 %v1309
  %v1311 = vpop.xlane.xlu0 %1310
  %v1312 = vsel %vm348, %v1304, -inf
  %1313 = vmax.xlane.f32.xlu0 %v1312
  %v1314 = vpop.xlane.xlu0 %1313
  %v1315 = vsel %vm348, %v1305, -inf
  %1316 = vmax.xlane.f32.xlu0 %v1315
  %v1317 = vpop.xlane.xlu0 %1316
  %v1318 = vsub.f32 %v1302, %v1308
  %v1319 = vsub.f32 %v1303, %v1311
  %v1320 = vsub.f32 %v1304, %v1314
  %v1321 = vsub.f32 %v1305, %v1317
  %v1322 = vmul.f32 %v1318, 1.442695
  %v1323 = vpow.pop %v1322
  %v1324 = vmul.f32 %v1319, 1.442695
  %v1325 = vpow.pop %v1324
  %v1326 = vmul.f32 %v1320, 1.442695
  %v1327 = vpow.pop %v1326
  %v1328 = vmul.f32 %v1321, 1.442695
  %v1329 = vpow.pop %v1328
  %v1330 = vsel %vm348, %v1323, 0.0
  %1331 = vadd.xlane.f32.xlu0 %v1330
  %v1332 = vpop.xlane.xlu0 %1331
  %v1333 = vsel %vm348, %v1325, 0.0
  %1334 = vadd.xlane.f32.xlu0 %v1333
  %v1335 = vpop.xlane.xlu0 %1334
  %v1336 = vsel %vm348, %v1327, 0.0
  %1337 = vadd.xlane.f32.xlu0 %v1336
  %v1338 = vpop.xlane.xlu0 %1337
  %v1339 = vsel %vm348, %v1329, 0.0
  %1340 = vadd.xlane.f32.xlu0 %v1339
  %v1341 = vpop.xlane.xlu0 %1340
  %1342 = vrot.lane.b32.xlu0 %v125, 88
  %v1343 = vpop.permute.xlu0 %1342
  %1344 = vrot.lane.b32.xlu0 %v130, 88
  %v1345 = vpop.permute.xlu0 %1344
  %1346 = vrot.lane.b32.xlu0 %v135, 88
  %v1347 = vpop.permute.xlu0 %1346
  %1348 = vrot.lane.b32.xlu0 %v140, 88
  %v1349 = vpop.permute.xlu0 %1348
  %v1355 = vsel %vm348, %v1323, 0
  %v1358 = vsel %vm348, %v1325, 0
  %v1361 = vsel %vm348, %v1327, 0
  %v1364 = vsel %vm348, %v1329, 0
  %1366 = vmatprep.subr.mxu0 0.0
  %1367 = vmatpush1.msra.mxu0 0.0
  %1368 = vmatprep.subr.mxu0 0.0
  %1369 = vmatpush1.msra.mxu0 0.0
  %1370 = vmatprep.subr.mxu0 0.0
  %1371 = vmatpush1.msra.mxu0 0.0
  %1372 = vmatprep.subr.mxu0 0.0
  %1373 = vmatpush1.msra.mxu0 0.0
  %1374 = vmatprep.subr.mxu0 0.0
  %1375 = vmatpush1.msra.mxu0 0.0
  %1376 = vmatprep.subr.mxu0 0.0
  %1377 = vmatpush1.msra.mxu0 0.0
  %1378 = vmatprep.subr.mxu0 0.0
  %1379 = vmatpush1.msra.mxu0 0.0
  %1380 = vmatprep.subr.mxu0 0.0
  %1381 = vmatpush1.msra.mxu0 0.0
  %1382 = vmatprep.subr.mxu0 0.0
  %1383 = vmatpush1.msra.mxu0 0.0
  %1384 = vmatprep.subr.mxu0 0.0
  %1385 = vmatpush1.msra.mxu0 0.0
  %1386 = vmatprep.subr.mxu0 0.0
  %1387 = vmatpush1.msra.mxu0 0.0
  %1388 = vmatprep.subr.mxu0 0.0
  %1389 = vmatpush1.msra.mxu0 0.0
  %1390 = vmatprep.subr.mxu0 0.0
  %1391 = vmatpush1.msra.mxu0 %v1349
  %1392 = vmatprep.subr.mxu0 0.0
  %1393 = vmatpush1.msra.mxu0 %v1347
  %1394 = vmatprep.subr.mxu0 0.0
  %1395 = vmatpush1.msra.mxu0 %v1345
  %1396 = vmatprep.subr.mxu0 0.0
  %1397 = vmatpush1.msra.mxu0 %v1343
  %1398 = vmatprep.subr.mxu0 0.0
  %1399 = vmatpush2.msra.mxu0 0.0
  %1400 = vmatprep.subr.mxu0 0.0
  %1401 = vmatpush2.msra.mxu0 0.0
  %1402 = vmatprep.subr.mxu0 0.0
  %1403 = vmatpush2.msra.mxu0 0.0
  %1404 = vmatprep.subr.mxu0 0.0
  %1405 = vmatpush2.msra.mxu0 0.0
  %1406 = vmatprep.subr.mxu0 0.0
  %1407 = vmatpush2.msra.mxu0 0.0
  %1408 = vmatprep.subr.mxu0 0.0
  %1409 = vmatpush2.msra.mxu0 0.0
  %1410 = vmatprep.subr.mxu0 0.0
  %1411 = vmatpush2.msra.mxu0 0.0
  %1412 = vmatprep.subr.mxu0 0.0
  %1413 = vmatpush2.msra.mxu0 0.0
  %1414 = vmatprep.subr.mxu0 0.0
  %1415 = vmatpush2.msra.mxu0 0.0
  %1416 = vmatprep.subr.mxu0 0.0
  %1417 = vmatpush2.msra.mxu0 0.0
  %1418 = vmatprep.subr.mxu0 0.0
  %1419 = vmatpush2.msra.mxu0 0.0
  %1420 = vmatprep.subr.mxu0 0.0
  %1421 = vmatpush2.msra.mxu0 0.0
  %1422 = vmatprep.subr.mxu0 0.0
  %1423 = vmatpush2.msra.mxu0 0.0
  %1424 = vmatprep.subr.mxu0 0.0
  %1425 = vmatpush2.msra.mxu0 0.0
  %1426 = vmatprep.subr.mxu0 0.0
  %1427 = vmatpush2.msra.mxu0 0.0
  %1428 = vmatprep.subr.mxu0 0.0
  %1429 = vmatpush2.msra.mxu0 0.0
  %1430 = vmatprep.mubr.f32.mxu0 0.0
  %1431 = vmatmul.mubr.f32.gmra.mxu0 %v1355
  %v1432 = vpop.f32.mrf.mxu0
  %v1433 = vadd.f32 0.0, %v1432
  %v1434 = vpop.f32.mrf.mxu0
  %1435 = vmatprep.mubr.f32.mxu0 0.0
  %1436 = vmatmul.mubr.f32.gmra.mxu0 %v1358
  %v1437 = vpop.f32.mrf.mxu0
  %v1438 = vadd.f32 0.0, %v1437
  %v1439 = vpop.f32.mrf.mxu0
  %1440 = vmatprep.mubr.f32.mxu0 0.0
  %1441 = vmatmul.mubr.f32.gmra.mxu0 %v1361
  %v1442 = vpop.f32.mrf.mxu0
  %v1443 = vadd.f32 0.0, %v1442
  %v1444 = vpop.f32.mrf.mxu0
  %1445 = vmatprep.mubr.f32.mxu0 0.0
  %1446 = vmatmul.mubr.f32.gmra.mxu0 %v1364
  %v1447 = vpop.f32.mrf.mxu0
  %v1448 = vadd.f32 0.0, %v1447
  %v1449 = vpop.f32.mrf.mxu0
  %1450 = vdwg.mxu0
  %v1451 = vrcp.pop %v1332
  %v1452 = vrcp.pop %v1335
  %v1453 = vrcp.pop %v1338
  %v1454 = vrcp.pop %v1341
  %v1455 = vmul.f32 %v1433, %v1451
  %v1456 = vmul.f32 %v1438, %v1452
  %v1457 = vmul.f32 %v1443, %v1453
  %v1458 = vmul.f32 %v1448, %v1454
  %1459 = vset.pattern.permute.xlu0 6
  %1460 = vperm.xlu0 %1459, %v286
  %v1461 = vpop.permute.xlu0 %1460
  %1463 = vset.pattern.permute.xlu0 6
  %1464 = vperm.xlu0 %1463, %v291
  %v1465 = vpop.permute.xlu0 %1464
  %1467 = vset.pattern.permute.xlu0 6
  %1468 = vperm.xlu0 %1467, %v296
  %v1469 = vpop.permute.xlu0 %1468
  %1471 = vset.pattern.permute.xlu0 6
  %1472 = vperm.xlu0 %1471, %v301
  %v1473 = vpop.permute.xlu0 %1472
  %v1475 = vlaneseq
  %v1476 = vshrl.u32 %v1475, 7
  %v1477 = vsub.s32 6, %v1476
  %v1478 = vrot.slane %v214, %v1477
  %v1479 = vadd.f32 %v1461, %v1478
  %v1480 = vadd.f32 %v1465, %v1478
  %v1481 = vadd.f32 %v1469, %v1478
  %v1482 = vadd.f32 %v1473, %v1478
  %vm1483 = vcmp.gt.f32.partialorder %v1479, 0.0
  %vm1484 = vcmp.gt.f32.partialorder %v1480, 0.0
  %vm1485 = vcmp.gt.f32.partialorder %v1481, 0.0
  %vm1486 = vcmp.gt.f32.partialorder %v1482, 0.0
  %v1487 = vmul.f32 %v1479, 0.2
  %v1488 = vmul.f32 %v1480, 0.2
  %v1489 = vmul.f32 %v1481, 0.2
  %v1490 = vmul.f32 %v1482, 0.2
  %v1491 = vsel %vm1483, %v1479, %v1487
  %v1492 = vsel %vm1484, %v1480, %v1488
  %v1493 = vsel %vm1485, %v1481, %v1489
  %v1494 = vsel %vm1486, %v1482, %v1490
  %v1495 = vadd.f32 %v1491, %v39
  %v1496 = vadd.f32 %v1492, %v40
  %v1497 = vadd.f32 %v1493, %v41
  %v1498 = vadd.f32 %v1494, %v42
  %v1499 = vsel %vm348, %v1495, -inf
  %1500 = vmax.xlane.f32.xlu0 %v1499
  %v1501 = vpop.xlane.xlu0 %1500
  %v1502 = vsel %vm348, %v1496, -inf
  %1503 = vmax.xlane.f32.xlu0 %v1502
  %v1504 = vpop.xlane.xlu0 %1503
  %v1505 = vsel %vm348, %v1497, -inf
  %1506 = vmax.xlane.f32.xlu0 %v1505
  %v1507 = vpop.xlane.xlu0 %1506
  %v1508 = vsel %vm348, %v1498, -inf
  %1509 = vmax.xlane.f32.xlu0 %v1508
  %v1510 = vpop.xlane.xlu0 %1509
  %v1511 = vsub.f32 %v1495, %v1501
  %v1512 = vsub.f32 %v1496, %v1504
  %v1513 = vsub.f32 %v1497, %v1507
  %v1514 = vsub.f32 %v1498, %v1510
  %v1515 = vmul.f32 %v1511, 1.442695
  %v1516 = vpow.pop %v1515
  %v1517 = vmul.f32 %v1512, 1.442695
  %v1518 = vpow.pop %v1517
  %v1519 = vmul.f32 %v1513, 1.442695
  %v1520 = vpow.pop %v1519
  %v1521 = vmul.f32 %v1514, 1.442695
  %v1522 = vpow.pop %v1521
  %v1523 = vsel %vm348, %v1516, 0.0
  %1524 = vadd.xlane.f32.xlu0 %v1523
  %v1525 = vpop.xlane.xlu0 %1524
  %v1526 = vsel %vm348, %v1518, 0.0
  %1527 = vadd.xlane.f32.xlu0 %v1526
  %v1528 = vpop.xlane.xlu0 %1527
  %v1529 = vsel %vm348, %v1520, 0.0
  %1530 = vadd.xlane.f32.xlu0 %v1529
  %v1531 = vpop.xlane.xlu0 %1530
  %v1532 = vsel %vm348, %v1522, 0.0
  %1533 = vadd.xlane.f32.xlu0 %v1532
  %v1534 = vpop.xlane.xlu0 %1533
  %1535 = vrot.lane.b32.xlu0 %v125, 80
  %v1536 = vpop.permute.xlu0 %1535
  %1537 = vrot.lane.b32.xlu0 %v130, 80
  %v1538 = vpop.permute.xlu0 %1537
  %1539 = vrot.lane.b32.xlu0 %v135, 80
  %v1540 = vpop.permute.xlu0 %1539
  %1541 = vrot.lane.b32.xlu0 %v140, 80
  %v1542 = vpop.permute.xlu0 %1541
  %v1548 = vsel %vm348, %v1516, 0
  %v1551 = vsel %vm348, %v1518, 0
  %v1554 = vsel %vm348, %v1520, 0
  %v1557 = vsel %vm348, %v1522, 0
  %1559 = vmatprep.subr.mxu0 0.0
  %1560 = vmatpush1.msra.mxu0 0.0
  %1561 = vmatprep.subr.mxu0 0.0
  %1562 = vmatpush1.msra.mxu0 0.0
  %1563 = vmatprep.subr.mxu0 0.0
  %1564 = vmatpush1.msra.mxu0 0.0
  %1565 = vmatprep.subr.mxu0 0.0
  %1566 = vmatpush1.msra.mxu0 0.0
  %1567 = vmatprep.subr.mxu0 0.0
  %1568 = vmatpush1.msra.mxu0 0.0
  %1569 = vmatprep.subr.mxu0 0.0
  %1570 = vmatpush1.msra.mxu0 0.0
  %1571 = vmatprep.subr.mxu0 0.0
  %1572 = vmatpush1.msra.mxu0 0.0
  %1573 = vmatprep.subr.mxu0 0.0
  %1574 = vmatpush1.msra.mxu0 0.0
  %1575 = vmatprep.subr.mxu0 0.0
  %1576 = vmatpush1.msra.mxu0 0.0
  %1577 = vmatprep.subr.mxu0 0.0
  %1578 = vmatpush1.msra.mxu0 0.0
  %1579 = vmatprep.subr.mxu0 0.0
  %1580 = vmatpush1.msra.mxu0 0.0
  %1581 = vmatprep.subr.mxu0 0.0
  %1582 = vmatpush1.msra.mxu0 0.0
  %1583 = vmatprep.subr.mxu0 0.0
  %1584 = vmatpush1.msra.mxu0 %v1542
  %1585 = vmatprep.subr.mxu0 0.0
  %1586 = vmatpush1.msra.mxu0 %v1540
  %1587 = vmatprep.subr.mxu0 0.0
  %1588 = vmatpush1.msra.mxu0 %v1538
  %1589 = vmatprep.subr.mxu0 0.0
  %1590 = vmatpush1.msra.mxu0 %v1536
  %1591 = vmatprep.subr.mxu0 0.0
  %1592 = vmatpush2.msra.mxu0 0.0
  %1593 = vmatprep.subr.mxu0 0.0
  %1594 = vmatpush2.msra.mxu0 0.0
  %1595 = vmatprep.subr.mxu0 0.0
  %1596 = vmatpush2.msra.mxu0 0.0
  %1597 = vmatprep.subr.mxu0 0.0
  %1598 = vmatpush2.msra.mxu0 0.0
  %1599 = vmatprep.subr.mxu0 0.0
  %1600 = vmatpush2.msra.mxu0 0.0
  %1601 = vmatprep.subr.mxu0 0.0
  %1602 = vmatpush2.msra.mxu0 0.0
  %1603 = vmatprep.subr.mxu0 0.0
  %1604 = vmatpush2.msra.mxu0 0.0
  %1605 = vmatprep.subr.mxu0 0.0
  %1606 = vmatpush2.msra.mxu0 0.0
  %1607 = vmatprep.subr.mxu0 0.0
  %1608 = vmatpush2.msra.mxu0 0.0
  %1609 = vmatprep.subr.mxu0 0.0
  %1610 = vmatpush2.msra.mxu0 0.0
  %1611 = vmatprep.subr.mxu0 0.0
  %1612 = vmatpush2.msra.mxu0 0.0
  %1613 = vmatprep.subr.mxu0 0.0
  %1614 = vmatpush2.msra.mxu0 0.0
  %1615 = vmatprep.subr.mxu0 0.0
  %1616 = vmatpush2.msra.mxu0 0.0
  %1617 = vmatprep.subr.mxu0 0.0
  %1618 = vmatpush2.msra.mxu0 0.0
  %1619 = vmatprep.subr.mxu0 0.0
  %1620 = vmatpush2.msra.mxu0 0.0
  %1621 = vmatprep.subr.mxu0 0.0
  %1622 = vmatpush2.msra.mxu0 0.0
  %1623 = vmatprep.mubr.f32.mxu0 0.0
  %1624 = vmatmul.mubr.f32.gmra.mxu0 %v1548
  %v1625 = vpop.f32.mrf.mxu0
  %v1626 = vadd.f32 0.0, %v1625
  %v1627 = vpop.f32.mrf.mxu0
  %1628 = vmatprep.mubr.f32.mxu0 0.0
  %1629 = vmatmul.mubr.f32.gmra.mxu0 %v1551
  %v1630 = vpop.f32.mrf.mxu0
  %v1631 = vadd.f32 0.0, %v1630
  %v1632 = vpop.f32.mrf.mxu0
  %1633 = vmatprep.mubr.f32.mxu0 0.0
  %1634 = vmatmul.mubr.f32.gmra.mxu0 %v1554
  %v1635 = vpop.f32.mrf.mxu0
  %v1636 = vadd.f32 0.0, %v1635
  %v1637 = vpop.f32.mrf.mxu0
  %1638 = vmatprep.mubr.f32.mxu0 0.0
  %1639 = vmatmul.mubr.f32.gmra.mxu0 %v1557
  %v1640 = vpop.f32.mrf.mxu0
  %v1641 = vadd.f32 0.0, %v1640
  %v1642 = vpop.f32.mrf.mxu0
  %1643 = vdwg.mxu0
  %v1644 = vrcp.pop %v1525
  %v1645 = vrcp.pop %v1528
  %v1646 = vrcp.pop %v1531
  %v1647 = vrcp.pop %v1534
  %v1648 = vmul.f32 %v1626, %v1644
  %v1649 = vmul.f32 %v1631, %v1645
  %v1650 = vmul.f32 %v1636, %v1646
  %v1651 = vmul.f32 %v1641, %v1647
  %1652 = vset.pattern.permute.xlu0 7
  %1653 = vperm.xlu0 %1652, %v286
  %v1654 = vpop.permute.xlu0 %1653
  %1656 = vset.pattern.permute.xlu0 7
  %1657 = vperm.xlu0 %1656, %v291
  %v1658 = vpop.permute.xlu0 %1657
  %1660 = vset.pattern.permute.xlu0 7
  %1661 = vperm.xlu0 %1660, %v296
  %v1662 = vpop.permute.xlu0 %1661
  %1664 = vset.pattern.permute.xlu0 7
  %1665 = vperm.xlu0 %1664, %v301
  %v1666 = vpop.permute.xlu0 %1665
  %v1668 = vlaneseq
  %v1669 = vshrl.u32 %v1668, 7
  %v1670 = vsub.s32 7, %v1669
  %v1671 = vrot.slane %v214, %v1670
  %v1672 = vadd.f32 %v1654, %v1671
  %v1673 = vadd.f32 %v1658, %v1671
  %v1674 = vadd.f32 %v1662, %v1671
  %v1675 = vadd.f32 %v1666, %v1671
  %vm1676 = vcmp.gt.f32.partialorder %v1672, 0.0
  %vm1677 = vcmp.gt.f32.partialorder %v1673, 0.0
  %vm1678 = vcmp.gt.f32.partialorder %v1674, 0.0
  %vm1679 = vcmp.gt.f32.partialorder %v1675, 0.0
  %v1680 = vmul.f32 %v1672, 0.2
  %v1681 = vmul.f32 %v1673, 0.2
  %v1682 = vmul.f32 %v1674, 0.2
  %v1683 = vmul.f32 %v1675, 0.2
  %v1684 = vsel %vm1676, %v1672, %v1680
  %v1685 = vsel %vm1677, %v1673, %v1681
  %v1686 = vsel %vm1678, %v1674, %v1682
  %v1687 = vsel %vm1679, %v1675, %v1683
  %v1688 = vadd.f32 %v1684, %v39
  %v1689 = vadd.f32 %v1685, %v40
  %v1690 = vadd.f32 %v1686, %v41
  %v1691 = vadd.f32 %v1687, %v42
  %v1692 = vsel %vm348, %v1688, -inf
  %1693 = vmax.xlane.f32.xlu0 %v1692
  %v1694 = vpop.xlane.xlu0 %1693
  %v1695 = vsel %vm348, %v1689, -inf
  %1696 = vmax.xlane.f32.xlu0 %v1695
  %v1697 = vpop.xlane.xlu0 %1696
  %v1698 = vsel %vm348, %v1690, -inf
  %1699 = vmax.xlane.f32.xlu0 %v1698
  %v1700 = vpop.xlane.xlu0 %1699
  %v1701 = vsel %vm348, %v1691, -inf
  %1702 = vmax.xlane.f32.xlu0 %v1701
  %v1703 = vpop.xlane.xlu0 %1702
  %v1704 = vsub.f32 %v1688, %v1694
  %v1705 = vsub.f32 %v1689, %v1697
  %v1706 = vsub.f32 %v1690, %v1700
  %v1707 = vsub.f32 %v1691, %v1703
  %v1708 = vmul.f32 %v1704, 1.442695
  %v1709 = vpow.pop %v1708
  %v1710 = vmul.f32 %v1705, 1.442695
  %v1711 = vpow.pop %v1710
  %v1712 = vmul.f32 %v1706, 1.442695
  %v1713 = vpow.pop %v1712
  %v1714 = vmul.f32 %v1707, 1.442695
  %v1715 = vpow.pop %v1714
  %v1716 = vsel %vm348, %v1709, 0.0
  %1717 = vadd.xlane.f32.xlu0 %v1716
  %v1718 = vpop.xlane.xlu0 %1717
  %v1719 = vsel %vm348, %v1711, 0.0
  %1720 = vadd.xlane.f32.xlu0 %v1719
  %v1721 = vpop.xlane.xlu0 %1720
  %v1722 = vsel %vm348, %v1713, 0.0
  %1723 = vadd.xlane.f32.xlu0 %v1722
  %v1724 = vpop.xlane.xlu0 %1723
  %v1725 = vsel %vm348, %v1715, 0.0
  %1726 = vadd.xlane.f32.xlu0 %v1725
  %v1727 = vpop.xlane.xlu0 %1726
  %1728 = vrot.lane.b32.xlu0 %v125, 72
  %v1729 = vpop.permute.xlu0 %1728
  %1730 = vrot.lane.b32.xlu0 %v130, 72
  %v1731 = vpop.permute.xlu0 %1730
  %1732 = vrot.lane.b32.xlu0 %v135, 72
  %v1733 = vpop.permute.xlu0 %1732
  %1734 = vrot.lane.b32.xlu0 %v140, 72
  %v1735 = vpop.permute.xlu0 %1734
  %v1741 = vsel %vm348, %v1709, 0
  %v1744 = vsel %vm348, %v1711, 0
  %v1747 = vsel %vm348, %v1713, 0
  %v1750 = vsel %vm348, %v1715, 0
  %1752 = vmatprep.subr.mxu0 0.0
  %1753 = vmatpush1.msra.mxu0 0.0
  %1754 = vmatprep.subr.mxu0 0.0
  %1755 = vmatpush1.msra.mxu0 0.0
  %1756 = vmatprep.subr.mxu0 0.0
  %1757 = vmatpush1.msra.mxu0 0.0
  %1758 = vmatprep.subr.mxu0 0.0
  %1759 = vmatpush1.msra.mxu0 0.0
  %1760 = vmatprep.subr.mxu0 0.0
  %1761 = vmatpush1.msra.mxu0 0.0
  %1762 = vmatprep.subr.mxu0 0.0
  %1763 = vmatpush1.msra.mxu0 0.0
  %1764 = vmatprep.subr.mxu0 0.0
  %1765 = vmatpush1.msra.mxu0 0.0
  %1766 = vmatprep.subr.mxu0 0.0
  %1767 = vmatpush1.msra.mxu0 0.0
  %1768 = vmatprep.subr.mxu0 0.0
  %1769 = vmatpush1.msra.mxu0 0.0
  %1770 = vmatprep.subr.mxu0 0.0
  %1771 = vmatpush1.msra.mxu0 0.0
  %1772 = vmatprep.subr.mxu0 0.0
  %1773 = vmatpush1.msra.mxu0 0.0
  %1774 = vmatprep.subr.mxu0 0.0
  %1775 = vmatpush1.msra.mxu0 0.0
  %1776 = vmatprep.subr.mxu0 0.0
  %1777 = vmatpush1.msra.mxu0 %v1735
  %1778 = vmatprep.subr.mxu0 0.0
  %1779 = vmatpush1.msra.mxu0 %v1733
  %1780 = vmatprep.subr.mxu0 0.0
  %1781 = vmatpush1.msra.mxu0 %v1731
  %1782 = vmatprep.subr.mxu0 0.0
  %1783 = vmatpush1.msra.mxu0 %v1729
  %1784 = vmatprep.subr.mxu0 0.0
  %1785 = vmatpush2.msra.mxu0 0.0
  %1786 = vmatprep.subr.mxu0 0.0
  %1787 = vmatpush2.msra.mxu0 0.0
  %1788 = vmatprep.subr.mxu0 0.0
  %1789 = vmatpush2.msra.mxu0 0.0
  %1790 = vmatprep.subr.mxu0 0.0
  %1791 = vmatpush2.msra.mxu0 0.0
  %1792 = vmatprep.subr.mxu0 0.0
  %1793 = vmatpush2.msra.mxu0 0.0
  %1794 = vmatprep.subr.mxu0 0.0
  %1795 = vmatpush2.msra.mxu0 0.0
  %1796 = vmatprep.subr.mxu0 0.0
  %1797 = vmatpush2.msra.mxu0 0.0
  %1798 = vmatprep.subr.mxu0 0.0
  %1799 = vmatpush2.msra.mxu0 0.0
  %1800 = vmatprep.subr.mxu0 0.0
  %1801 = vmatpush2.msra.mxu0 0.0
  %1802 = vmatprep.subr.mxu0 0.0
  %1803 = vmatpush2.msra.mxu0 0.0
  %1804 = vmatprep.subr.mxu0 0.0
  %1805 = vmatpush2.msra.mxu0 0.0
  %1806 = vmatprep.subr.mxu0 0.0
  %1807 = vmatpush2.msra.mxu0 0.0
  %1808 = vmatprep.subr.mxu0 0.0
  %1809 = vmatpush2.msra.mxu0 0.0
  %1810 = vmatprep.subr.mxu0 0.0
  %1811 = vmatpush2.msra.mxu0 0.0
  %1812 = vmatprep.subr.mxu0 0.0
  %1813 = vmatpush2.msra.mxu0 0.0
  %1814 = vmatprep.subr.mxu0 0.0
  %1815 = vmatpush2.msra.mxu0 0.0
  %1816 = vmatprep.mubr.f32.mxu0 0.0
  %1817 = vmatmul.mubr.f32.gmra.mxu0 %v1741
  %v1818 = vpop.f32.mrf.mxu0
  %v1819 = vadd.f32 0.0, %v1818
  %v1820 = vpop.f32.mrf.mxu0
  %1821 = vmatprep.mubr.f32.mxu0 0.0
  %1822 = vmatmul.mubr.f32.gmra.mxu0 %v1744
  %v1823 = vpop.f32.mrf.mxu0
  %v1824 = vadd.f32 0.0, %v1823
  %v1825 = vpop.f32.mrf.mxu0
  %1826 = vmatprep.mubr.f32.mxu0 0.0
  %1827 = vmatmul.mubr.f32.gmra.mxu0 %v1747
  %v1828 = vpop.f32.mrf.mxu0
  %v1829 = vadd.f32 0.0, %v1828
  %v1830 = vpop.f32.mrf.mxu0
  %1831 = vmatprep.mubr.f32.mxu0 0.0
  %1832 = vmatmul.mubr.f32.gmra.mxu0 %v1750
  %v1833 = vpop.f32.mrf.mxu0
  %v1834 = vadd.f32 0.0, %v1833
  %v1835 = vpop.f32.mrf.mxu0
  %1836 = vdwg.mxu0
  %v1837 = vrcp.pop %v1718
  %v1838 = vrcp.pop %v1721
  %v1839 = vrcp.pop %v1724
  %v1840 = vrcp.pop %v1727
  %v1841 = vmul.f32 %v1819, %v1837
  %v1842 = vmul.f32 %v1824, %v1838
  %v1843 = vmul.f32 %v1829, %v1839
  %v1844 = vmul.f32 %v1834, %v1840
  %1849 = vrot.lane.b32.xlu0 %v683, 8
  %v1850 = vpop.permute.xlu0 %1849
  %1851 = vrot.lane.b32.xlu0 %v684, 8
  %v1852 = vpop.permute.xlu0 %1851
  %1853 = vrot.lane.b32.xlu0 %v685, 8
  %v1854 = vpop.permute.xlu0 %1853
  %1855 = vrot.lane.b32.xlu0 %v686, 8
  %v1856 = vpop.permute.xlu0 %1855
  %1865 = vrot.lane.b32.xlu0 %v876, 16
  %v1866 = vpop.permute.xlu0 %1865
  %1867 = vrot.lane.b32.xlu0 %v877, 16
  %v1868 = vpop.permute.xlu0 %1867
  %1869 = vrot.lane.b32.xlu0 %v878, 16
  %v1870 = vpop.permute.xlu0 %1869
  %1871 = vrot.lane.b32.xlu0 %v879, 16
  %v1872 = vpop.permute.xlu0 %1871
  %1881 = vrot.lane.b32.xlu0 %v1069, 24
  %v1882 = vpop.permute.xlu0 %1881
  %1883 = vrot.lane.b32.xlu0 %v1070, 24
  %v1884 = vpop.permute.xlu0 %1883
  %1885 = vrot.lane.b32.xlu0 %v1071, 24
  %v1886 = vpop.permute.xlu0 %1885
  %1887 = vrot.lane.b32.xlu0 %v1072, 24
  %v1888 = vpop.permute.xlu0 %1887
  %1897 = vrot.lane.b32.xlu0 %v1262, 32
  %v1898 = vpop.permute.xlu0 %1897
  %1899 = vrot.lane.b32.xlu0 %v1263, 32
  %v1900 = vpop.permute.xlu0 %1899
  %1901 = vrot.lane.b32.xlu0 %v1264, 32
  %v1902 = vpop.permute.xlu0 %1901
  %1903 = vrot.lane.b32.xlu0 %v1265, 32
  %v1904 = vpop.permute.xlu0 %1903
  %1913 = vrot.lane.b32.xlu0 %v1455, 40
  %v1914 = vpop.permute.xlu0 %1913
  %1915 = vrot.lane.b32.xlu0 %v1456, 40
  %v1916 = vpop.permute.xlu0 %1915
  %1917 = vrot.lane.b32.xlu0 %v1457, 40
  %v1918 = vpop.permute.xlu0 %1917
  %1919 = vrot.lane.b32.xlu0 %v1458, 40
  %v1920 = vpop.permute.xlu0 %1919
  %1929 = vrot.lane.b32.xlu0 %v1648, 48
  %v1930 = vpop.permute.xlu0 %1929
  %1931 = vrot.lane.b32.xlu0 %v1649, 48
  %v1932 = vpop.permute.xlu0 %1931
  %1933 = vrot.lane.b32.xlu0 %v1650, 48
  %v1934 = vpop.permute.xlu0 %1933
  %1935 = vrot.lane.b32.xlu0 %v1651, 48
  %v1936 = vpop.permute.xlu0 %1935
  %1945 = vrot.lane.b32.xlu0 %v1841, 56
  %v1946 = vpop.permute.xlu0 %1945
  %1947 = vrot.lane.b32.xlu0 %v1842, 56
  %v1948 = vpop.permute.xlu0 %1947
  %1949 = vrot.lane.b32.xlu0 %v1843, 56
  %v1950 = vpop.permute.xlu0 %1949
  %1951 = vrot.lane.b32.xlu0 %v1844, 56
  %v1952 = vpop.permute.xlu0 %1951
  %vm1957 = vcmask 64512
  %v1958 = vsel %vm1957, %v486, %v1850
  %v1959 = vsel %vm1957, %v487, %v1852
  %v1960 = vsel %vm1957, %v488, %v1854
  %v1961 = vsel %vm1957, %v489, %v1856
  %v1962 = vsel %vm45, %v1958, %v1866
  %v1963 = vsel %vm45, %v1959, %v1868
  %v1964 = vsel %vm45, %v1960, %v1870
  %v1965 = vsel %vm45, %v1961, %v1872
  %vm1966 = vcmask 195584
  %v1967 = vsel %vm1966, %v1962, %v1882
  %v1968 = vsel %vm1966, %v1963, %v1884
  %v1969 = vsel %vm1966, %v1964, %v1886
  %v1970 = vsel %vm1966, %v1965, %v1888
  %v1971 = vsel %vm348, %v1967, %v1898
  %v1972 = vsel %vm348, %v1968, %v1900
  %v1973 = vsel %vm348, %v1969, %v1902
  %v1974 = vsel %vm348, %v1970, %v1904
  %vm1975 = vcmask 326656
  %v1976 = vsel %vm1975, %v1971, %v1914
  %v1977 = vsel %vm1975, %v1972, %v1916
  %v1978 = vsel %vm1975, %v1973, %v1918
  %v1979 = vsel %vm1975, %v1974, %v1920
  %vm1980 = vcmask 392192
  %v1981 = vsel %vm1980, %v1976, %v1930
  %v1982 = vsel %vm1980, %v1977, %v1932
  %v1983 = vsel %vm1980, %v1978, %v1934
  %v1984 = vsel %vm1980, %v1979, %v1936
  %vm1985 = vcmask 457728
  %v1986 = vsel %vm1985, %v1981, %v1946
  %v1987 = vsel %vm1985, %v1982, %v1948
  %v1988 = vsel %vm1985, %v1983, %v1950
  %v1989 = vsel %vm1985, %v1984, %v1952
  %v1990 = vld [vmem:[%s5] sm:$0x1]
  %v1992 = vlaneseq
  %v1993 = vshrl.u32 %v1992, 7
  %v1994 = vsub.s32 0, %v1993
  %v1995 = vrot.slane %v1990, %v1994
  %v1997 = vadd.f32 %v1986, %v1995
  %v1998 = vadd.f32 %v1987, %v1995
  %v1999 = vadd.f32 %v1988, %v1995
  %v2000 = vadd.f32 %v1989, %v1995
  %vm2001 = vcmp.gt.f32.partialorder %v1997, 0.0
  %vm2002 = vcmp.gt.f32.partialorder %v1998, 0.0
  %vm2003 = vcmp.gt.f32.partialorder %v1999, 0.0
  %vm2004 = vcmp.gt.f32.partialorder %v2000, 0.0
  %v2005 = vmul.f32 %v1997, 1.442695
  %v2006 = vpow.pop %v2005
  %v2007 = vmul.f32 %v1998, 1.442695
  %v2008 = vpow.pop %v2007
  %v2009 = vmul.f32 %v1999, 1.442695
  %v2010 = vpow.pop %v2009
  %v2011 = vmul.f32 %v2000, 1.442695
  %v2012 = vpow.pop %v2011
  %v2013 = vsub.f32 %v2006, 1.0
  %v2014 = vsub.f32 %v2008, 1.0
  %v2015 = vsub.f32 %v2010, 1.0
  %v2016 = vsub.f32 %v2012, 1.0
  %v2017 = vsel %vm2001, %v1997, %v2013
  %v2018 = vsel %vm2002, %v1998, %v2014
  %v2019 = vsel %vm2003, %v1999, %v2015
  %v2020 = vsel %vm2004, %v2000, %v2016
  %v2021 = vld [vmem:[%s6] sm:$0xff]
  %v2022 = vld [vmem:[%s6 + $0x8] sm:$0xff]
  %v2023 = vld [vmem:[%s6 + $0x10] sm:$0xff]
  %v2024 = vld [vmem:[%s6 + $0x18] sm:$0xff]
  %v2025 = vld [vmem:[%s6 + $0x20] sm:$0xff]
  %v2026 = vld [vmem:[%s6 + $0x28] sm:$0xff]
  %v2027 = vld [vmem:[%s6 + $0x30] sm:$0xff]
  %v2028 = vld [vmem:[%s6 + $0x38] sm:$0xff]
  %vm2029 = vcmask 523264
  %v2031 = vsel %vm2029, %v2017, 0
  %v2034 = vsel %vm2029, %v2018, 0
  %v2037 = vsel %vm2029, %v2019, 0
  %v2040 = vsel %vm2029, %v2020, 0
  %2042 = vmatprep.subr.mxu0 0.0
  %2043 = vmatpush1.msra.mxu0 0.0
  %2044 = vmatprep.subr.mxu0 0.0
  %2045 = vmatpush1.msra.mxu0 0.0
  %2046 = vmatprep.subr.mxu0 0.0
  %2047 = vmatpush1.msra.mxu0 0.0
  %2048 = vmatprep.subr.mxu0 0.0
  %2049 = vmatpush1.msra.mxu0 0.0
  %2050 = vmatprep.subr.mxu0 0.0
  %2051 = vmatpush1.msra.mxu0 0.0
  %2052 = vmatprep.subr.mxu0 0.0
  %2053 = vmatpush1.msra.mxu0 0.0
  %2054 = vmatprep.subr.mxu0 0.0
  %2055 = vmatpush1.msra.mxu0 0.0
  %2056 = vmatprep.subr.mxu0 0.0
  %2057 = vmatpush1.msra.mxu0 0.0
  %2058 = vmatprep.subr.mxu0 0.0
  %2059 = vmatpush1.msra.mxu0 %v2028
  %2060 = vmatprep.subr.mxu0 0.0
  %2061 = vmatpush1.msra.mxu0 %v2027
  %2062 = vmatprep.subr.mxu0 0.0
  %2063 = vmatpush1.msra.mxu0 %v2026
  %2064 = vmatprep.subr.mxu0 0.0
  %2065 = vmatpush1.msra.mxu0 %v2025
  %2066 = vmatprep.subr.mxu0 0.0
  %2067 = vmatpush1.msra.mxu0 %v2024
  %2068 = vmatprep.subr.mxu0 0.0
  %2069 = vmatpush1.msra.mxu0 %v2023
  %2070 = vmatprep.subr.mxu0 0.0
  %2071 = vmatpush1.msra.mxu0 %v2022
  %2072 = vmatprep.subr.mxu0 0.0
  %2073 = vmatpush1.msra.mxu0 %v2021
  %2074 = vmatprep.subr.mxu0 0.0
  %2075 = vmatpush2.msra.mxu0 0.0
  %2076 = vmatprep.subr.mxu0 0.0
  %2077 = vmatpush2.msra.mxu0 0.0
  %2078 = vmatprep.subr.mxu0 0.0
  %2079 = vmatpush2.msra.mxu0 0.0
  %2080 = vmatprep.subr.mxu0 0.0
  %2081 = vmatpush2.msra.mxu0 0.0
  %2082 = vmatprep.subr.mxu0 0.0
  %2083 = vmatpush2.msra.mxu0 0.0
  %2084 = vmatprep.subr.mxu0 0.0
  %2085 = vmatpush2.msra.mxu0 0.0
  %2086 = vmatprep.subr.mxu0 0.0
  %2087 = vmatpush2.msra.mxu0 0.0
  %2088 = vmatprep.subr.mxu0 0.0
  %2089 = vmatpush2.msra.mxu0 0.0
  %2090 = vmatprep.subr.mxu0 0.0
  %2091 = vmatpush2.msra.mxu0 0.0
  %2092 = vmatprep.subr.mxu0 0.0
  %2093 = vmatpush2.msra.mxu0 0.0
  %2094 = vmatprep.subr.mxu0 0.0
  %2095 = vmatpush2.msra.mxu0 0.0
  %2096 = vmatprep.subr.mxu0 0.0
  %2097 = vmatpush2.msra.mxu0 0.0
  %2098 = vmatprep.subr.mxu0 0.0
  %2099 = vmatpush2.msra.mxu0 0.0
  %2100 = vmatprep.subr.mxu0 0.0
  %2101 = vmatpush2.msra.mxu0 0.0
  %2102 = vmatprep.subr.mxu0 0.0
  %2103 = vmatpush2.msra.mxu0 0.0
  %2104 = vmatprep.subr.mxu0 0.0
  %2105 = vmatpush2.msra.mxu0 0.0
  %2106 = vmatprep.mubr.f32.mxu0 0.0
  %2107 = vmatmul.mubr.f32.gmra.mxu0 %v2031
  %v2108 = vpop.f32.mrf.mxu0
  %v2109 = vadd.f32 0.0, %v2108
  %v2110 = vpop.f32.mrf.mxu0
  %2111 = vmatprep.mubr.f32.mxu0 0.0
  %2112 = vmatmul.mubr.f32.gmra.mxu0 %v2034
  %v2113 = vpop.f32.mrf.mxu0
  %v2114 = vadd.f32 0.0, %v2113
  %v2115 = vpop.f32.mrf.mxu0
  %2116 = vmatprep.mubr.f32.mxu0 0.0
  %2117 = vmatmul.mubr.f32.gmra.mxu0 %v2037
  %v2118 = vpop.f32.mrf.mxu0
  %v2119 = vadd.f32 0.0, %v2118
  %v2120 = vpop.f32.mrf.mxu0
  %2121 = vmatprep.mubr.f32.mxu0 0.0
  %2122 = vmatmul.mubr.f32.gmra.mxu0 %v2040
  %v2123 = vpop.f32.mrf.mxu0
  %v2124 = vadd.f32 0.0, %v2123
  %v2125 = vpop.f32.mrf.mxu0
  %2126 = vdwg.mxu0
  %v2127 = vld [vmem:[%s7] sm:$0x1]
  %v2129 = vsel %vm2029, %v2127, 0
  %2131 = vmatprep.subr.mxu0 0.0
  %2132 = vmatpush1.xpose.msra.mxu0 0.0
  %2133 = vmatprep.subr.mxu0 0.0
  %2134 = vmatpush1.xpose.msra.mxu0 0.0
  %2135 = vmatprep.subr.mxu0 0.0
  %2136 = vmatpush1.xpose.msra.mxu0 0.0
  %2137 = vmatprep.subr.mxu0 0.0
  %2138 = vmatpush1.xpose.msra.mxu0 0.0
  %2139 = vmatprep.subr.mxu0 0.0
  %2140 = vmatpush1.xpose.msra.mxu0 0.0
  %2141 = vmatprep.subr.mxu0 0.0
  %2142 = vmatpush1.xpose.msra.mxu0 0.0
  %2143 = vmatprep.subr.mxu0 0.0
  %2144 = vmatpush1.xpose.msra.mxu0 0.0
  %2145 = vmatprep.subr.mxu0 0.0
  %2146 = vmatpush1.xpose.msra.mxu0 0.0
  %2147 = vmatprep.subr.mxu0 0.0
  %2148 = vmatpush1.xpose.msra.mxu0 0.0
  %2149 = vmatprep.subr.mxu0 0.0
  %2150 = vmatpush1.xpose.msra.mxu0 0.0
  %2151 = vmatprep.subr.mxu0 0.0
  %2152 = vmatpush1.xpose.msra.mxu0 0.0
  %2153 = vmatprep.subr.mxu0 0.0
  %2154 = vmatpush1.xpose.msra.mxu0 0.0
  %2155 = vmatprep.subr.mxu0 0.0
  %2156 = vmatpush1.xpose.msra.mxu0 %v2040
  %2157 = vmatprep.subr.mxu0 0.0
  %2158 = vmatpush1.xpose.msra.mxu0 %v2037
  %2159 = vmatprep.subr.mxu0 0.0
  %2160 = vmatpush1.xpose.msra.mxu0 %v2034
  %2161 = vmatprep.subr.mxu0 0.0
  %2162 = vmatpush1.xpose.msra.mxu0 %v2031
  %2163 = vmatprep.subr.mxu0 0.0
  %2164 = vmatpush2.xpose.msra.mxu0 0.0
  %2165 = vmatprep.subr.mxu0 0.0
  %2166 = vmatpush2.xpose.msra.mxu0 0.0
  %2167 = vmatprep.subr.mxu0 0.0
  %2168 = vmatpush2.xpose.msra.mxu0 0.0
  %2169 = vmatprep.subr.mxu0 0.0
  %2170 = vmatpush2.xpose.msra.mxu0 0.0
  %2171 = vmatprep.subr.mxu0 0.0
  %2172 = vmatpush2.xpose.msra.mxu0 0.0
  %2173 = vmatprep.subr.mxu0 0.0
  %2174 = vmatpush2.xpose.msra.mxu0 0.0
  %2175 = vmatprep.subr.mxu0 0.0
  %2176 = vmatpush2.xpose.msra.mxu0 0.0
  %2177 = vmatprep.subr.mxu0 0.0
  %2178 = vmatpush2.xpose.msra.mxu0 0.0
  %2179 = vmatprep.subr.mxu0 0.0
  %2180 = vmatpush2.xpose.msra.mxu0 0.0
  %2181 = vmatprep.subr.mxu0 0.0
  %2182 = vmatpush2.xpose.msra.mxu0 0.0
  %2183 = vmatprep.subr.mxu0 0.0
  %2184 = vmatpush2.xpose.msra.mxu0 0.0
  %2185 = vmatprep.subr.mxu0 0.0
  %2186 = vmatpush2.xpose.msra.mxu0 0.0
  %2187 = vmatprep.subr.mxu0 0.0
  %2188 = vmatpush2.xpose.msra.mxu0 0.0
  %2189 = vmatprep.subr.mxu0 0.0
  %2190 = vmatpush2.xpose.msra.mxu0 0.0
  %2191 = vmatprep.subr.mxu0 0.0
  %2192 = vmatpush2.xpose.msra.mxu0 0.0
  %2193 = vmatprep.subr.mxu0 0.0
  %2194 = vmatpush2.xpose.msra.mxu0 0.0
  %2195 = vmatprep.mubr.f32.mxu0 0.0
  %2196 = vmatmul.mubr.f32.gmra.mxu0 %v2129
  %v2197 = vpop.f32.mrf.mxu0
  %v2198 = vadd.f32 0.0, %v2197
  %v2199 = vpop.f32.mrf.mxu0
  %2200 = vdwg.mxu0
  %v2201 = vld [vmem:[%s8] sm:$0xff]
  %v2202 = vld [vmem:[%s8 + $0x8] sm:$0xff]
  %v2203 = vld [vmem:[%s8 + $0x10] sm:$0xff]
  %v2204 = vld [vmem:[%s8 + $0x18] sm:$0xff]
  %v2205 = vld [vmem:[%s8 + $0x20] sm:$0xff]
  %v2206 = vld [vmem:[%s8 + $0x28] sm:$0xff]
  %v2207 = vld [vmem:[%s8 + $0x30] sm:$0xff]
  %v2208 = vld [vmem:[%s8 + $0x38] sm:$0xff]
  %2209 = vmatprep.subr.mxu0 0.0
  %2210 = vmatpush1.msra.mxu0 0.0
  %2211 = vmatprep.subr.mxu0 0.0
  %2212 = vmatpush1.msra.mxu0 0.0
  %2213 = vmatprep.subr.mxu0 0.0
  %2214 = vmatpush1.msra.mxu0 0.0
  %2215 = vmatprep.subr.mxu0 0.0
  %2216 = vmatpush1.msra.mxu0 0.0
  %2217 = vmatprep.subr.mxu0 0.0
  %2218 = vmatpush1.msra.mxu0 0.0
  %2219 = vmatprep.subr.mxu0 0.0
  %2220 = vmatpush1.msra.mxu0 0.0
  %2221 = vmatprep.subr.mxu0 0.0
  %2222 = vmatpush1.msra.mxu0 0.0
  %2223 = vmatprep.subr.mxu0 0.0
  %2224 = vmatpush1.msra.mxu0 0.0
  %2225 = vmatprep.subr.mxu0 0.0
  %2226 = vmatpush1.msra.mxu0 %v2208
  %2227 = vmatprep.subr.mxu0 0.0
  %2228 = vmatpush1.msra.mxu0 %v2207
  %2229 = vmatprep.subr.mxu0 0.0
  %2230 = vmatpush1.msra.mxu0 %v2206
  %2231 = vmatprep.subr.mxu0 0.0
  %2232 = vmatpush1.msra.mxu0 %v2205
  %2233 = vmatprep.subr.mxu0 0.0
  %2234 = vmatpush1.msra.mxu0 %v2204
  %2235 = vmatprep.subr.mxu0 0.0
  %2236 = vmatpush1.msra.mxu0 %v2203
  %2237 = vmatprep.subr.mxu0 0.0
  %2238 = vmatpush1.msra.mxu0 %v2202
  %2239 = vmatprep.subr.mxu0 0.0
  %2240 = vmatpush1.msra.mxu0 %v2201
  %2241 = vmatprep.subr.mxu0 0.0
  %2242 = vmatpush2.msra.mxu0 0.0
  %2243 = vmatprep.subr.mxu0 0.0
  %2244 = vmatpush2.msra.mxu0 0.0
  %2245 = vmatprep.subr.mxu0 0.0
  %2246 = vmatpush2.msra.mxu0 0.0
  %2247 = vmatprep.subr.mxu0 0.0
  %2248 = vmatpush2.msra.mxu0 0.0
  %2249 = vmatprep.subr.mxu0 0.0
  %2250 = vmatpush2.msra.mxu0 0.0
  %2251 = vmatprep.subr.mxu0 0.0
  %2252 = vmatpush2.msra.mxu0 0.0
  %2253 = vmatprep.subr.mxu0 0.0
  %2254 = vmatpush2.msra.mxu0 0.0
  %2255 = vmatprep.subr.mxu0 0.0
  %2256 = vmatpush2.msra.mxu0 0.0
  %2257 = vmatprep.subr.mxu0 0.0
  %2258 = vmatpush2.msra.mxu0 0.0
  %2259 = vmatprep.subr.mxu0 0.0
  %2260 = vmatpush2.msra.mxu0 0.0
  %2261 = vmatprep.subr.mxu0 0.0
  %2262 = vmatpush2.msra.mxu0 0.0
  %2263 = vmatprep.subr.mxu0 0.0
  %2264 = vmatpush2.msra.mxu0 0.0
  %2265 = vmatprep.subr.mxu0 0.0
  %2266 = vmatpush2.msra.mxu0 0.0
  %2267 = vmatprep.subr.mxu0 0.0
  %2268 = vmatpush2.msra.mxu0 0.0
  %2269 = vmatprep.subr.mxu0 0.0
  %2270 = vmatpush2.msra.mxu0 0.0
  %2271 = vmatprep.subr.mxu0 0.0
  %2272 = vmatpush2.msra.mxu0 0.0
  %2273 = vmatprep.mubr.f32.mxu0 0.0
  %2274 = vmatmul.mubr.f32.gmra.mxu0 %v2031
  %v2275 = vpop.f32.mrf.mxu0
  %v2276 = vadd.f32 0.0, %v2275
  %v2277 = vpop.f32.mrf.mxu0
  %2278 = vmatprep.mubr.f32.mxu0 0.0
  %2279 = vmatmul.mubr.f32.gmra.mxu0 %v2034
  %v2280 = vpop.f32.mrf.mxu0
  %v2281 = vadd.f32 0.0, %v2280
  %v2282 = vpop.f32.mrf.mxu0
  %2283 = vmatprep.mubr.f32.mxu0 0.0
  %2284 = vmatmul.mubr.f32.gmra.mxu0 %v2037
  %v2285 = vpop.f32.mrf.mxu0
  %v2286 = vadd.f32 0.0, %v2285
  %v2287 = vpop.f32.mrf.mxu0
  %2288 = vmatprep.mubr.f32.mxu0 0.0
  %2289 = vmatmul.mubr.f32.gmra.mxu0 %v2040
  %v2290 = vpop.f32.mrf.mxu0
  %v2291 = vadd.f32 0.0, %v2290
  %v2292 = vpop.f32.mrf.mxu0
  %2293 = vdwg.mxu0
  %2295 = vset.pattern.permute.xlu0 0
  %2296 = vperm.xlu0 %2295, %v2276
  %v2297 = vpop.permute.xlu0 %2296
  %2300 = vset.pattern.permute.xlu0 0
  %2301 = vperm.xlu0 %2300, %v2281
  %v2302 = vpop.permute.xlu0 %2301
  %2305 = vset.pattern.permute.xlu0 0
  %2306 = vperm.xlu0 %2305, %v2286
  %v2307 = vpop.permute.xlu0 %2306
  %2310 = vset.pattern.permute.xlu0 0
  %2311 = vperm.xlu0 %2310, %v2291
  %v2312 = vpop.permute.xlu0 %2311
  %v2314 = vlaneseq
  %v2315 = vshrl.u32 %v2314, 7
  %v2316 = vsub.s32 0, %v2315
  %v2317 = vrot.slane %v2198, %v2316
  %v2318 = vadd.f32 %v2297, %v2317
  %v2319 = vadd.f32 %v2302, %v2317
  %v2320 = vadd.f32 %v2307, %v2317
  %v2321 = vadd.f32 %v2312, %v2317
  %vm2322 = vcmp.gt.f32.partialorder %v2318, 0.0
  %vm2323 = vcmp.gt.f32.partialorder %v2319, 0.0
  %vm2324 = vcmp.gt.f32.partialorder %v2320, 0.0
  %vm2325 = vcmp.gt.f32.partialorder %v2321, 0.0
  %v2326 = vmul.f32 %v2318, 0.2
  %v2327 = vmul.f32 %v2319, 0.2
  %v2328 = vmul.f32 %v2320, 0.2
  %v2329 = vmul.f32 %v2321, 0.2
  %v2330 = vsel %vm2322, %v2318, %v2326
  %v2331 = vsel %vm2323, %v2319, %v2327
  %v2332 = vsel %vm2324, %v2320, %v2328
  %v2333 = vsel %vm2325, %v2321, %v2329
  %v2334 = vadd.f32 %v2330, %v39
  %v2335 = vadd.f32 %v2331, %v40
  %v2336 = vadd.f32 %v2332, %v41
  %v2337 = vadd.f32 %v2333, %v42
  %v2338 = vsel %vm348, %v2334, -inf
  %2339 = vmax.xlane.f32.xlu0 %v2338
  %v2340 = vpop.xlane.xlu0 %2339
  %v2341 = vsel %vm348, %v2335, -inf
  %2342 = vmax.xlane.f32.xlu0 %v2341
  %v2343 = vpop.xlane.xlu0 %2342
  %v2344 = vsel %vm348, %v2336, -inf
  %2345 = vmax.xlane.f32.xlu0 %v2344
  %v2346 = vpop.xlane.xlu0 %2345
  %v2347 = vsel %vm348, %v2337, -inf
  %2348 = vmax.xlane.f32.xlu0 %v2347
  %v2349 = vpop.xlane.xlu0 %2348
  %v2350 = vsub.f32 %v2334, %v2340
  %v2351 = vsub.f32 %v2335, %v2343
  %v2352 = vsub.f32 %v2336, %v2346
  %v2353 = vsub.f32 %v2337, %v2349
  %v2354 = vmul.f32 %v2350, 1.442695
  %v2355 = vpow.pop %v2354
  %v2356 = vmul.f32 %v2351, 1.442695
  %v2357 = vpow.pop %v2356
  %v2358 = vmul.f32 %v2352, 1.442695
  %v2359 = vpow.pop %v2358
  %v2360 = vmul.f32 %v2353, 1.442695
  %v2361 = vpow.pop %v2360
  %v2362 = vsel %vm348, %v2355, 0.0
  %2363 = vadd.xlane.f32.xlu0 %v2362
  %v2364 = vpop.xlane.xlu0 %2363
  %v2365 = vsel %vm348, %v2357, 0.0
  %2366 = vadd.xlane.f32.xlu0 %v2365
  %v2367 = vpop.xlane.xlu0 %2366
  %v2368 = vsel %vm348, %v2359, 0.0
  %2369 = vadd.xlane.f32.xlu0 %v2368
  %v2370 = vpop.xlane.xlu0 %2369
  %v2371 = vsel %vm348, %v2361, 0.0
  %2372 = vadd.xlane.f32.xlu0 %v2371
  %v2373 = vpop.xlane.xlu0 %2372
  %v2375 = vsel %vm348, %v2355, 0
  %v2378 = vsel %vm348, %v2357, 0
  %v2381 = vsel %vm348, %v2359, 0
  %v2384 = vsel %vm348, %v2361, 0
  %2386 = vmatprep.subr.mxu0 0.0
  %2387 = vmatpush1.msra.mxu0 0.0
  %2388 = vmatprep.subr.mxu0 0.0
  %2389 = vmatpush1.msra.mxu0 0.0
  %2390 = vmatprep.subr.mxu0 0.0
  %2391 = vmatpush1.msra.mxu0 0.0
  %2392 = vmatprep.subr.mxu0 0.0
  %2393 = vmatpush1.msra.mxu0 0.0
  %2394 = vmatprep.subr.mxu0 0.0
  %2395 = vmatpush1.msra.mxu0 0.0
  %2396 = vmatprep.subr.mxu0 0.0
  %2397 = vmatpush1.msra.mxu0 0.0
  %2398 = vmatprep.subr.mxu0 0.0
  %2399 = vmatpush1.msra.mxu0 0.0
  %2400 = vmatprep.subr.mxu0 0.0
  %2401 = vmatpush1.msra.mxu0 0.0
  %2402 = vmatprep.subr.mxu0 0.0
  %2403 = vmatpush1.msra.mxu0 0.0
  %2404 = vmatprep.subr.mxu0 0.0
  %2405 = vmatpush1.msra.mxu0 0.0
  %2406 = vmatprep.subr.mxu0 0.0
  %2407 = vmatpush1.msra.mxu0 0.0
  %2408 = vmatprep.subr.mxu0 0.0
  %2409 = vmatpush1.msra.mxu0 0.0
  %2410 = vmatprep.subr.mxu0 0.0
  %2411 = vmatpush1.msra.mxu0 %v2124
  %2412 = vmatprep.subr.mxu0 0.0
  %2413 = vmatpush1.msra.mxu0 %v2119
  %2414 = vmatprep.subr.mxu0 0.0
  %2415 = vmatpush1.msra.mxu0 %v2114
  %2416 = vmatprep.subr.mxu0 0.0
  %2417 = vmatpush1.msra.mxu0 %v2109
  %2418 = vmatprep.subr.mxu0 0.0
  %2419 = vmatpush2.msra.mxu0 0.0
  %2420 = vmatprep.subr.mxu0 0.0
  %2421 = vmatpush2.msra.mxu0 0.0
  %2422 = vmatprep.subr.mxu0 0.0
  %2423 = vmatpush2.msra.mxu0 0.0
  %2424 = vmatprep.subr.mxu0 0.0
  %2425 = vmatpush2.msra.mxu0 0.0
  %2426 = vmatprep.subr.mxu0 0.0
  %2427 = vmatpush2.msra.mxu0 0.0
  %2428 = vmatprep.subr.mxu0 0.0
  %2429 = vmatpush2.msra.mxu0 0.0
  %2430 = vmatprep.subr.mxu0 0.0
  %2431 = vmatpush2.msra.mxu0 0.0
  %2432 = vmatprep.subr.mxu0 0.0
  %2433 = vmatpush2.msra.mxu0 0.0
  %2434 = vmatprep.subr.mxu0 0.0
  %2435 = vmatpush2.msra.mxu0 0.0
  %2436 = vmatprep.subr.mxu0 0.0
  %2437 = vmatpush2.msra.mxu0 0.0
  %2438 = vmatprep.subr.mxu0 0.0
  %2439 = vmatpush2.msra.mxu0 0.0
  %2440 = vmatprep.subr.mxu0 0.0
  %2441 = vmatpush2.msra.mxu0 0.0
  %2442 = vmatprep.subr.mxu0 0.0
  %2443 = vmatpush2.msra.mxu0 0.0
  %2444 = vmatprep.subr.mxu0 0.0
  %2445 = vmatpush2.msra.mxu0 0.0
  %2446 = vmatprep.subr.mxu0 0.0
  %2447 = vmatpush2.msra.mxu0 0.0
  %2448 = vmatprep.subr.mxu0 0.0
  %2449 = vmatpush2.msra.mxu0 0.0
  %2450 = vmatprep.mubr.f32.mxu0 0.0
  %2451 = vmatmul.mubr.f32.gmra.mxu0 %v2375
  %v2452 = vpop.f32.mrf.mxu0
  %v2453 = vadd.f32 0.0, %v2452
  %v2454 = vpop.f32.mrf.mxu0
  %2455 = vmatprep.mubr.f32.mxu0 0.0
  %2456 = vmatmul.mubr.f32.gmra.mxu0 %v2378
  %v2457 = vpop.f32.mrf.mxu0
  %v2458 = vadd.f32 0.0, %v2457
  %v2459 = vpop.f32.mrf.mxu0
  %2460 = vmatprep.mubr.f32.mxu0 0.0
  %2461 = vmatmul.mubr.f32.gmra.mxu0 %v2381
  %v2462 = vpop.f32.mrf.mxu0
  %v2463 = vadd.f32 0.0, %v2462
  %v2464 = vpop.f32.mrf.mxu0
  %2465 = vmatprep.mubr.f32.mxu0 0.0
  %2466 = vmatmul.mubr.f32.gmra.mxu0 %v2384
  %v2467 = vpop.f32.mrf.mxu0
  %v2468 = vadd.f32 0.0, %v2467
  %v2469 = vpop.f32.mrf.mxu0
  %2470 = vdwg.mxu0
  %v2471 = vrcp.pop %v2364
  %v2472 = vrcp.pop %v2367
  %v2473 = vrcp.pop %v2370
  %v2474 = vrcp.pop %v2373
  %v2475 = vmul.f32 %v2453, %v2471
  %v2476 = vmul.f32 %v2458, %v2472
  %v2477 = vmul.f32 %v2463, %v2473
  %v2478 = vmul.f32 %v2468, %v2474
  %v2479 = vld [vmem:[%s9] sm:$0x1]
  %v2481 = vlaneseq
  %v2482 = vshrl.u32 %v2481, 7
  %v2483 = vsub.s32 0, %v2482
  %v2484 = vrot.slane %v2479, %v2483
  %v2486 = vadd.f32 %v2475, %v2484
  %v2487 = vadd.f32 %v2476, %v2484
  %v2488 = vadd.f32 %v2477, %v2484
  %v2489 = vadd.f32 %v2478, %v2484
  %vm2490 = vcmask 31744
  %v2491 = vsel %vm2490, %v2486, -inf
  %2492 = vmax.xlane.f32.xlu0 %v2491
  %v2493 = vpop.xlane.xlu0 %2492
  %v2494 = vsel %vm2490, %v2487, -inf
  %2495 = vmax.xlane.f32.xlu0 %v2494
  %v2496 = vpop.xlane.xlu0 %2495
  %v2497 = vsel %vm2490, %v2488, -inf
  %2498 = vmax.xlane.f32.xlu0 %v2497
  %v2499 = vpop.xlane.xlu0 %2498
  %v2500 = vsel %vm2490, %v2489, -inf
  %2501 = vmax.xlane.f32.xlu0 %v2500
  %v2502 = vpop.xlane.xlu0 %2501
  %v2503 = vsub.f32 %v2486, %v2493
  %v2504 = vsub.f32 %v2487, %v2496
  %v2505 = vsub.f32 %v2488, %v2499
  %v2506 = vsub.f32 %v2489, %v2502
  %v2507 = vmul.f32 %v2503, 1.442695
  %v2508 = vpow.pop %v2507
  %v2509 = vmul.f32 %v2504, 1.442695
  %v2510 = vpow.pop %v2509
  %v2511 = vmul.f32 %v2505, 1.442695
  %v2512 = vpow.pop %v2511
  %v2513 = vmul.f32 %v2506, 1.442695
  %v2514 = vpow.pop %v2513
  %v2515 = vsel %vm2490, %v2508, 0.0
  %2516 = vadd.xlane.f32.xlu0 %v2515
  %v2517 = vpop.xlane.xlu0 %2516
  %v2518 = vsel %vm2490, %v2510, 0.0
  %2519 = vadd.xlane.f32.xlu0 %v2518
  %v2520 = vpop.xlane.xlu0 %2519
  %v2521 = vsel %vm2490, %v2512, 0.0
  %2522 = vadd.xlane.f32.xlu0 %v2521
  %v2523 = vpop.xlane.xlu0 %2522
  %v2524 = vsel %vm2490, %v2514, 0.0
  %2525 = vadd.xlane.f32.xlu0 %v2524
  %v2526 = vpop.xlane.xlu0 %2525
  %v2527 = vlog2.pop %v2517
  %v2528 = vmul.f32 %v2527, 0.6931472
  %v2529 = vlog2.pop %v2520
  %v2530 = vmul.f32 %v2529, 0.6931472
  %v2531 = vlog2.pop %v2523
  %v2532 = vmul.f32 %v2531, 0.6931472
  %v2533 = vlog2.pop %v2526
  %v2534 = vmul.f32 %v2533, 0.6931472
  %v2535 = vadd.f32 %v2528, %v2493
  %v2536 = vadd.f32 %v2530, %v2496
  %v2537 = vadd.f32 %v2532, %v2499
  %v2538 = vadd.f32 %v2534, %v2502
  %v2539 = vsub.f32 %v2486, %v2535
  %v2540 = vsub.f32 %v2487, %v2536
  %v2541 = vsub.f32 %v2488, %v2537
  %v2542 = vsub.f32 %v2489, %v2538
  %2543 = vst.msk [vmem:[%s10] sm:$0xff] %vm2490, %v2539
  %2544 = vst.msk [vmem:[%s10 + $0x8] sm:$0xff] %vm2490, %v2540
  %2545 = vst.msk [vmem:[%s10 + $0x10] sm:$0xff] %vm2490, %v2541
  %2546 = vst.msk [vmem:[%s10 + $0x18] sm:$0xff] %vm2490, %v2542
  // Predicated region
  $region42: #{net_forward.1} parent=0 // pred_check
    _
  $region43: #{net_forward.1} parent=0 // pred_check_branch
    %2548 = sbr.rel (0) target = $region45
  $region44: #{net_forward.1} parent=0 // pred_region
    _
  $region45: #{net_forward.1} parent=0 // pred_fallthru
    _
  // Predicated region
  $region46: #{net_forward.1} parent=0 // pred_check
    _
  $region47: #{net_forward.1} parent=0 // pred_check_branch
    %2550 = sbr.rel (0) target = $region49
  $region48: #{net_forward.1} parent=0 // pred_region
    _
  $region49: #{net_forward.1} parent=0 // pred_fallthru
    _

</llo_original>
